<compile_context>
chip_gen: v7x
topology: tpu7x:2x2x1
jax: 0.10.0
libtpu: 0.0.40
codegen_flags: <defaults>
</compile_context>

<pallas_src>
import functools

import numpy as np
import jax
import jax.numpy as jnp
from jax.experimental import pallas as pl
from jax.experimental.pallas import tpu as pltpu

F32 = jnp.float32
BF16 = jnp.bfloat16


def _round_up(x, m):
    return ((x + m - 1) // m) * m


# ----------------------------- fused forward kernel ------------------------------

def _gnn_forward_kernel(normalize_flags, post_acts, fuse_k, n_obs, n_nodes, *refs):
    """Entire GNNStack forward in one kernel invocation (no grid, whole arrays in VMEM).

    refs = [*inputs (order defined by _flatten_inputs), out_ref, x_scratch]
    """
    out_ref = refs[-2]
    x_scr = refs[-1]
    it = iter(refs[:-2])
    nxt = lambda: next(it)

    n_pad, D = x_scr.shape

    def mm(a, b):  # bf16 x bf16 -> f32 accumulation on the MXU
        return jnp.dot(a.astype(BF16), b.astype(BF16), preferred_element_type=F32)

    def mmT(a, b):  # a.T @ b (contract the leading/sublane axis) - transposed-LHS MXU matmul
        return jax.lax.dot_general(
            a.astype(BF16), b.astype(BF16),
            dimension_numbers=(((0,), (0,)), ((), ())),
            preferred_element_type=F32)

    def linear_cat(parts, w_ref, b_ref):
        """Linear over the (virtual) concat of `parts` along the feature dim.
        fuse_k=True : one K=sum(widths) matmul (fills the 256-deep MXU on v6e/v7x).
        fuse_k=False: split matmuls on static, tile-aligned row slices of the weight (v5e)."""
        if fuse_k:
            lhs = parts[0] if len(parts) == 1 else jnp.concatenate(parts, axis=-1)
            return mm(lhs, w_ref[...]) + b_ref[...]
        out = None
        off = 0
        for p in parts:
            w_part = w_ref[off:off + p.shape[-1], :]
            term = mm(p, w_part)
            out = term if out is None else out + term
            off += p.shape[-1]
        return out + b_ref[...]

    relu = lambda v: jnp.maximum(v, 0.0)
    sigmoid = lambda v: 0.5 * (jnp.tanh(0.5 * v) + 1.0)   # stable logistic on the EUP

    # ---------------- node_init ----------------
    attn = nxt()[...]                      # [n_obs, F] f32
    fnodes = nxt()[...]                    # [F, D]     bf16
    w_obs, b_obs = nxt(), nxt()
    w_feat, b_feat = nxt(), nxt()

    obs = sigmoid(mm(mm(attn, fnodes), w_obs[...]) + b_obs[...])
    feat = mm(fnodes, w_feat[...]) + b_feat[...]
    # torch.cat((obs, feat), dim=0) without a concat op; pad rows must be zero so the
    # one-hot matmuls never touch stale VMEM (NaN * 0 == NaN on the MXU accumulate).
    x_scr[...] = jnp.zeros_like(x_scr)
    x_scr[0:n_obs, :] = obs.astype(BF16)
    x_scr[n_obs:n_nodes, :] = feat.astype(BF16)
    x = x_scr[...]                         # [N_pad, D] bf16

    # ------- graph operators built from the lane-dense (2, E_pad) edge index -------
    ei = nxt()
    src_row = ei[0:1, :]                   # (1, E_pad) int32  (edge_index[0], -1 padding)
    dst_row = ei[1:2, :]                   # (1, E_pad) int32  (edge_index[1], -1 padding)
    e_cnt = src_row.shape[-1]
    node_iota = jax.lax.broadcasted_iota(jnp.int32, (n_pad, e_cnt), 0)
    onehot_src = jnp.where(node_iota == src_row, 1.0, 0.0).astype(BF16)   # [N_pad, E_pad]
    oh_dst_f32 = jnp.where(node_iota == dst_row, 1.0, 0.0)
    onehot_dst = oh_dst_f32.astype(BF16)                                  # [N_pad, E_pad]
    deg = jnp.sum(oh_dst_f32, axis=1, keepdims=True)                      # in-degree (exact)
    inv_deg = pl.reciprocal(jnp.maximum(deg, 1.0), approx=False)

    e = nxt()[...]                         # [E_pad, e_in_pad] bf16 (zero-padded lanes)

    # ---------------- EGSAGE conv + edge-update layers (statically unrolled) ----------------
    for norm in normalize_flags:
        w_msg, b_msg = nxt(), nxt()
        w_agg, b_agg = nxt(), nxt()
        w_edge, b_edge = nxt(), nxt()

        # x_j = x[edge_index[0]] : transposed one-hot gather on the MXU
        x_src = mmT(onehot_src, x).astype(BF16)
        # message = relu(Linear([x_j | edge_attr]))
        msg = relu(linear_cat([x_src, e], w_msg, b_msg))
        # mean aggregation over dst: exact 0/1 scatter-sum on the MXU, f32 1/deg scale
        aggr = (mm(onehot_dst, msg) * inv_deg).astype(BF16)
        # update = relu(Linear([aggr | x]))
        upd = relu(linear_cat([aggr, x], w_agg, b_agg))
        if norm:                           # F.normalize(p=2, dim=-1)
            ss = jnp.sum(upd * upd, axis=-1, keepdims=True)
            upd = upd * jax.lax.rsqrt(jnp.maximum(ss, 1e-24))
        x = upd.astype(BF16)

        # edge_attr = relu(Linear([x[src] | x[dst] | edge_attr]))
        x_i = mmT(onehot_src, x).astype(BF16)
        x_j = mmT(onehot_dst, x).astype(BF16)
        e = relu(linear_cat([x_i, x_j, e], w_edge, b_edge)).astype(BF16)

    # ---------------- node_post_mlp (dropout = identity at inference) ----------------
    h = x
    for act in post_acts:
        w, b = nxt(), nxt()
        h = mm(h, w[...]) + b[...]
        if act == "relu":
            h = relu(h)
    out_ref[...] = h.astype(out_ref.dtype)


# --------------------------- parameter construction ------------------------

def _linear_init(key, fan_in, fan_out):
    """nn.Linear-style init: U(-1/sqrt(fan_in), 1/sqrt(fan_in)); weight stored as [in, out]."""
    kw, kb = jax.random.split(key)
    lim = 1.0 / (fan_in ** 0.5)
    w = jax.random.uniform(kw, (fan_in, fan_out), minval=-lim, maxval=lim, dtype=F32)
    b = jax.random.uniform(kb, (fan_out,), minval=-lim, maxval=lim, dtype=F32).reshape(1, fan_out)
    return w, b


def _pad_row_blocks(w, row_sizes, padded_sizes):
    """Zero-pad each row-block of a stacked weight to its padded size (zero rows multiply
    zero-padded input columns, so the math is unchanged)."""
    splits = np.cumsum(row_sizes)[:-1].tolist()
    parts = jnp.split(w, splits, axis=0) if splits else [w]
    out = []
    for p, tgt in zip(parts, padded_sizes):
        if tgt > p.shape[0]:
            p = jnp.concatenate([p, jnp.zeros((tgt - p.shape[0], p.shape[1]), p.dtype)], axis=0)
        out.append(p)
    return jnp.concatenate(out, axis=0)


def init_gnnstack_params(key, node_input_dim, edge_input_dim, node_dim, edge_dim,
                         n_layers, post_hiddens, normalize_embs):
    e_in_pad = _round_up(max(edge_input_dim, 1), 128)   # lane-dense layer-0 edge features
    keys = iter(jax.random.split(key, 64))
    p = {}

    # __init_node: feature-node embeddings, torch.rand -> uniform [0, 1)
    p["feature_nodes"] = jax.random.uniform(
        next(keys), (node_input_dim, node_dim), dtype=F32).astype(BF16)
    w, b = _linear_init(next(keys), node_dim, node_dim)      # init_obs_mlp
    p["w_obs"], p["b_obs"] = w.astype(BF16), b
    w, b = _linear_init(next(keys), node_dim, node_dim)      # init_feature_mlp
    p["w_feat"], p["b_feat"] = w.astype(BF16), b

    # EGSAGE convs (edge_mode=1, aggr='mean'):
    #   message_lin: Linear(node_dim + edge_in, node_dim); agg_lin: Linear(2*node_dim, node_dim)
    p["convs"] = []
    e_dim_l, e_pad_l = edge_input_dim, e_in_pad
    for _ in range(n_layers):
        w_msg, b_msg = _linear_init(next(keys), node_dim + e_dim_l, node_dim)
        w_msg = _pad_row_blocks(w_msg, (node_dim, e_dim_l), (node_dim, e_pad_l))
        w_agg, b_agg = _linear_init(next(keys), 2 * node_dim, node_dim)
        p["convs"].append(dict(w_msg=w_msg.astype(BF16), b_msg=b_msg,
                               w_agg=w_agg.astype(BF16), b_agg=b_agg))
        e_dim_l, e_pad_l = edge_dim, edge_dim

    # edge_update_mlps[l]: Linear(2*node_dim + edge_in_l, edge_dim) + relu
    p["edge_mlps"] = []
    e_dim_l, e_pad_l = edge_input_dim, e_in_pad
    for _ in range(n_layers):
        w_e, b_e = _linear_init(next(keys), 2 * node_dim + e_dim_l, edge_dim)
        w_e = _pad_row_blocks(w_e, (2 * node_dim, e_dim_l), (2 * node_dim, e_pad_l))
        p["edge_mlps"].append(dict(w_edge=w_e.astype(BF16), b_edge=b_e))
        e_dim_l, e_pad_l = edge_dim, edge_dim

    # node_post_mlp: [Linear(node_dim, h) + relu + dropout]* , then Linear(h, node_dim)
    p["post"] = []
    post_acts = []
    in_d = node_dim
    for hdim in post_hiddens:
        w, b = _linear_init(next(keys), in_d, hdim)
        p["post"].append((w.astype(BF16), b))
        post_acts.append("relu")
        in_d = hdim
    w, b = _linear_init(next(keys), in_d, node_dim)
    p["post"].append((w.astype(BF16), b))
    post_acts.append(None)

    cfg = dict(normalize=tuple(normalize_embs), post_acts=tuple(post_acts),
               node_dim=node_dim, edge_dim=edge_dim,
               node_input_dim=node_input_dim, edge_input_dim=edge_input_dim,
               e_in_pad=e_in_pad)
    return p, cfg


def _flatten_inputs(params, attn, edge_index_pad, edge_attr_pad):
    # Order must mirror the nxt() calls in _gnn_forward_kernel.
    flat = [attn, params["feature_nodes"],
            params["w_obs"], params["b_obs"], params["w_feat"], params["b_feat"],
            edge_index_pad, edge_attr_pad]
    for conv, em in zip(params["convs"], params["edge_mlps"]):
        flat += [conv["w_msg"], conv["b_msg"], conv["w_agg"], conv["b_agg"],
                 em["w_edge"], em["b_edge"]]
    for (w, b) in params["post"]:
        flat += [w, b]
    return flat


def _default_fuse_k():
    # v5e's MXUs are 128x128 -> split K=128 matmuls already fill them; v6e/v7x are 256-deep
    # -> fuse the concatenated inputs into single K>=256 matmuls.
    try:
        kind = jax.devices()[0].device_kind.lower()
        return "v5" not in kind
    except Exception:
        return True


# ------------------------------ forward wrapper ------------------------------

def gnnstack_forward(params, cfg, x, edge_attr, edge_index, train_attr_value, fuse_k=None):
    """Mirrors GNNStack.forward(x, edge_attr, edge_index, train_attr_value);
    `x` is unused because the reference forward overwrites it with node_init(...)."""
    del x
    if fuse_k is None:
        fuse_k = _default_fuse_k()

    n_obs = int(train_attr_value.shape[0])
    n_feat, node_dim = (int(s) for s in params["feature_nodes"].shape)
    n_nodes = n_obs + n_feat
    n_pad = _round_up(n_nodes, 8)
    E = int(edge_index.shape[1])
    e_pad = _round_up(max(E, 1), 8)
    e_in_pad = cfg["e_in_pad"]

    # Graph / feature padding prep (tiny, O(E) bytes) done once outside the hot kernel.
    ei = jnp.full((2, e_pad), -1, dtype=jnp.int32)
    ei = ei.at[:, :E].set(edge_index.astype(jnp.int32))           # -1 never matches a node
    ea = jnp.zeros((e_pad, e_in_pad), dtype=BF16)
    ea = ea.at[:E, :edge_attr.shape[1]].set(edge_attr.astype(BF16))

    flat_inputs = _flatten_inputs(params, train_attr_value, ei, ea)
    kernel = functools.partial(_gnn_forward_kernel, tuple(cfg["normalize"]),
                               tuple(cfg["post_acts"]), bool(fuse_k), n_obs, n_nodes)

    # Rough, advisory cost estimate for XLA's scheduler.
    D = node_dim
    n_layers = len(cfg["normalize"])
    flops = 2 * n_obs * cfg["node_input_dim"] * D + 2 * n_nodes * D * D
    flops += n_layers * 2 * (3 * e_pad * n_pad * D              # one-hot gathers / scatter
                             + e_pad * (D + e_in_pad) * D        # message linear
                             + n_pad * e_pad * D                 # scatter-sum
                             + n_pad * 2 * D * D                 # agg linear
                             + e_pad * (2 * D + e_in_pad) * D)   # edge-update linear
    flops += 2 * len(params["post"]) * n_pad * D * D
    trans = n_obs * D + (n_layers + 1) * n_pad * D
    bytes_acc = sum(int(np.prod(a.shape)) * int(a.dtype.itemsize) for a in flat_inputs)
    bytes_acc += n_pad * D * 4

    out = pl.pallas_call(
        kernel,
        out_shape=jax.ShapeDtypeStruct((n_pad, node_dim), jnp.float32),
        # No grid: single program, whole arrays single-buffered in VMEM.
        in_specs=[pl.BlockSpec(memory_space=pltpu.MemorySpace.VMEM) for _ in flat_inputs],
        out_specs=pl.BlockSpec(memory_space=pltpu.MemorySpace.VMEM),
        scratch_shapes=[pltpu.VMEM((n_pad, node_dim), BF16)],
        compiler_params=pltpu.CompilerParams(vmem_limit_bytes=32 * 1024 * 1024),
        cost_estimate=pl.CostEstimate(flops=int(flops), transcendentals=int(trans),
                                      bytes_accessed=int(bytes_acc)),
    )(*flat_inputs)
    return out[:n_nodes]


# ------------------------ pure-JAX reference (same math) ------------------------

def _reference_forward(params, cfg, edge_attr, edge_index, attn):
    def mm(a, b):
        return jnp.dot(a.astype(BF16), b.astype(BF16), preferred_element_type=F32)
    relu = lambda v: jnp.maximum(v, 0.0)
    sigmoid = lambda v: 0.5 * (jnp.tanh(0.5 * v) + 1.0)

    fn = params["feature_nodes"]
    obs = sigmoid(mm(mm(attn, fn), params["w_obs"]) + params["b_obs"])
    feat = mm(fn, params["w_feat"]) + params["b_feat"]
    x = jnp.concatenate([obs, feat], axis=0).astype(BF16)
    n_nodes = x.shape[0]

    src, dst = edge_index[0], edge_index[1]
    ids = jnp.arange(n_nodes, dtype=jnp.int32)
    g_src = jnp.where(src[:, None] == ids[None, :], 1.0, 0.0).astype(BF16)   # [E, N]
    g_dst = jnp.where(dst[:, None] == ids[None, :], 1.0, 0.0).astype(BF16)   # [E, N]
    sc_f32 = jnp.where(ids[:, None] == dst[None, :], 1.0, 0.0)               # [N, E]
    inv_deg = 1.0 / jnp.maximum(jnp.sum(sc_f32, axis=1, keepdims=True), 1.0)
    sc = sc_f32.astype(BF16)

    e_in_pad = cfg["e_in_pad"]
    e = jnp.zeros((edge_attr.shape[0], e_in_pad), F32)
    e = e.at[:, :edge_attr.shape[1]].set(edge_attr).astype(BF16)

    for l, norm in enumerate(cfg["normalize"]):
        conv, em = params["convs"][l], params["edge_mlps"][l]
        x_src = mm(g_src, x).astype(BF16)
        msg = relu(mm(jnp.concatenate([x_src, e], -1), conv["w_msg"]) + conv["b_msg"])
        aggr = (mm(sc, msg) * inv_deg).astype(BF16)
        upd = relu(mm(jnp.concatenate([aggr, x], -1), conv["w_agg"]) + conv["b_agg"])
        if norm:
            ss = jnp.sum(upd * upd, axis=-1, keepdims=True)
            upd = upd * jax.lax.rsqrt(jnp.maximum(ss, 1e-24))
        x = upd.astype(BF16)
        x_i = mm(g_src, x).astype(BF16)
        x_j = mm(g_dst, x).astype(BF16)
        e = relu(mm(jnp.concatenate([x_i, x_j, e], -1), em["w_edge"]) + em["b_edge"]).astype(BF16)

    h = x
    for (w, b), act in zip(params["post"], cfg["post_acts"]):
        h = mm(h, w) + b
        if act == "relu":
            h = relu(h)
    return h


# ----------------------------------- main -----------------------------------

if __name__ == "__main__":
    key = jax.random.PRNGKey(0)
    k_par, k_attn, k_edge, k_idx, k_x = jax.random.split(key, 5)

    # small, module-consistent shapes (lane-dense hidden width)
    node_input_dim = 4      # number of features -> feature nodes
    edge_input_dim = 4
    node_dim = 128
    edge_dim = 128
    num_obs_nodes = 8
    n_layers = 2
    N = num_obs_nodes + node_input_dim   # total graph nodes after node_init concat
    E = 16                               # number of edges

    params, cfg = init_gnnstack_params(
        k_par, node_input_dim, edge_input_dim, node_dim, edge_dim,
        n_layers=n_layers, post_hiddens=(node_dim,), normalize_embs=(True,) * n_layers)

    train_attr_value = jax.random.normal(k_attn, (num_obs_nodes, node_input_dim), jnp.float32)
    edge_attr = jax.random.normal(k_edge, (E, edge_input_dim), jnp.float32)
    edge_index = jax.random.randint(k_idx, (2, E), 0, N, dtype=jnp.int32)
    x_dummy = jax.random.normal(k_x, (N, node_input_dim), jnp.float32)  # unused by forward

    out = gnnstack_forward(params, cfg, x_dummy, edge_attr, edge_index, train_attr_value)
    out = jax.block_until_ready(out)

    assert out.shape == (N, node_dim), out.shape
    assert bool(jnp.all(jnp.isfinite(out)))

    ref = _reference_forward(params, cfg, edge_attr, edge_index, train_attr_value)
    np.testing.assert_allclose(np.asarray(out), np.asarray(ref, dtype=np.float32),
                               rtol=2e-2, atol=2e-2)
    print("KERNEL_OK")
</pallas_src>

<mosaic_0001>
module attributes {stable_mosaic.version = 11 : i64} {
  func.func @_gnn_forward_kernel(%arg0: memref<8x4xf32, #tpu.memory_space<vmem>>, %arg1: memref<4x128xbf16, #tpu.memory_space<vmem>>, %arg2: memref<128x128xbf16, #tpu.memory_space<vmem>>, %arg3: memref<1x128xf32, #tpu.memory_space<vmem>>, %arg4: memref<128x128xbf16, #tpu.memory_space<vmem>>, %arg5: memref<1x128xf32, #tpu.memory_space<vmem>>, %arg6: memref<2x16xi32, #tpu.memory_space<vmem>>, %arg7: memref<16x128xbf16, #tpu.memory_space<vmem>>, %arg8: memref<256x128xbf16, #tpu.memory_space<vmem>>, %arg9: memref<1x128xf32, #tpu.memory_space<vmem>>, %arg10: memref<256x128xbf16, #tpu.memory_space<vmem>>, %arg11: memref<1x128xf32, #tpu.memory_space<vmem>>, %arg12: memref<384x128xbf16, #tpu.memory_space<vmem>>, %arg13: memref<1x128xf32, #tpu.memory_space<vmem>>, %arg14: memref<256x128xbf16, #tpu.memory_space<vmem>>, %arg15: memref<1x128xf32, #tpu.memory_space<vmem>>, %arg16: memref<256x128xbf16, #tpu.memory_space<vmem>>, %arg17: memref<1x128xf32, #tpu.memory_space<vmem>>, %arg18: memref<384x128xbf16, #tpu.memory_space<vmem>>, %arg19: memref<1x128xf32, #tpu.memory_space<vmem>>, %arg20: memref<128x128xbf16, #tpu.memory_space<vmem>>, %arg21: memref<1x128xf32, #tpu.memory_space<vmem>>, %arg22: memref<128x128xbf16, #tpu.memory_space<vmem>>, %arg23: memref<1x128xf32, #tpu.memory_space<vmem>>, %arg24: memref<16x128xf32, #tpu.memory_space<vmem>>, %arg25: memref<16x128xbf16, #tpu.memory_space<vmem>>) attributes {dimension_semantics = [], scalar_prefetch = 0 : i64, scratch_operands = 1 : i64, tpu.core_type = #tpu.core_type<tc>} {
    %c0 = arith.constant 0 : index
    %c0_0 = arith.constant 0 : index
    %0 = vector.load %arg0[%c0, %c0_0] : memref<8x4xf32, #tpu.memory_space<vmem>>, vector<8x4xf32>
    %c0_1 = arith.constant 0 : index
    %c0_2 = arith.constant 0 : index
    %1 = vector.load %arg1[%c0_1, %c0_2] : memref<4x128xbf16, #tpu.memory_space<vmem>>, vector<4x128xbf16>
    %2 = arith.truncf %0 : vector<8x4xf32> to vector<8x4xbf16>
    %cst = arith.constant dense<0.000000e+00> : vector<8x128xf32>
    %3 = tpu.matmul %2, %1, %cst {dimension_numbers = #tpu.dot_dimension_numbers<[1], [0], [0], [1], [0, 0, 1, 1], [], []>} : vector<8x4xbf16>, vector<4x128xbf16>, vector<8x128xf32> -> vector<8x128xf32>
    %c0_3 = arith.constant 0 : index
    %c0_4 = arith.constant 0 : index
    %4 = vector.load %arg2[%c0_3, %c0_4] : memref<128x128xbf16, #tpu.memory_space<vmem>>, vector<128x128xbf16>
    %5 = arith.truncf %3 : vector<8x128xf32> to vector<8x128xbf16>
    %cst_5 = arith.constant dense<0.000000e+00> : vector<8x128xf32>
    %6 = tpu.matmul %5, %4, %cst_5 {dimension_numbers = #tpu.dot_dimension_numbers<[1], [0], [0], [1], [0, 0, 1, 1], [], []>} : vector<8x128xbf16>, vector<128x128xbf16>, vector<8x128xf32> -> vector<8x128xf32>
    %c0_6 = arith.constant 0 : index
    %c0_7 = arith.constant 0 : index
    %7 = vector.load %arg3[%c0_6, %c0_7] : memref<1x128xf32, #tpu.memory_space<vmem>>, vector<1x128xf32>
    %8 = vector.broadcast %7 : vector<1x128xf32> to vector<8x128xf32>
    %9 = arith.addf %6, %8 : vector<8x128xf32>
    %cst_8 = arith.constant 5.000000e-01 : f32
    %10 = vector.broadcast %cst_8 : f32 to vector<8x128xf32>
    %11 = arith.mulf %10, %9 : vector<8x128xf32>
    %12 = math.tanh %11 : vector<8x128xf32>
    %cst_9 = arith.constant 1.000000e+00 : f32
    %13 = vector.broadcast %cst_9 : f32 to vector<8x128xf32>
    %14 = arith.addf %12, %13 : vector<8x128xf32>
    %cst_10 = arith.constant 5.000000e-01 : f32
    %15 = vector.broadcast %cst_10 : f32 to vector<8x128xf32>
    %16 = arith.mulf %15, %14 : vector<8x128xf32>
    %c0_11 = arith.constant 0 : index
    %c0_12 = arith.constant 0 : index
    %17 = vector.load %arg4[%c0_11, %c0_12] : memref<128x128xbf16, #tpu.memory_space<vmem>>, vector<128x128xbf16>
    %cst_13 = arith.constant dense<0.000000e+00> : vector<4x128xf32>
    %18 = tpu.matmul %1, %17, %cst_13 {dimension_numbers = #tpu.dot_dimension_numbers<[1], [0], [0], [1], [0, 0, 1, 1], [], []>} : vector<4x128xbf16>, vector<128x128xbf16>, vector<4x128xf32> -> vector<4x128xf32>
    %c0_14 = arith.constant 0 : index
    %c0_15 = arith.constant 0 : index
    %19 = vector.load %arg5[%c0_14, %c0_15] : memref<1x128xf32, #tpu.memory_space<vmem>>, vector<1x128xf32>
    %20 = vector.broadcast %19 : vector<1x128xf32> to vector<4x128xf32>
    %21 = arith.addf %18, %20 : vector<4x128xf32>
    %cst_16 = arith.constant 0.000000e+00 : bf16
    %22 = vector.broadcast %cst_16 : bf16 to vector<16x128xbf16>
    %c0_17 = arith.constant 0 : index
    %c0_18 = arith.constant 0 : index
    %23 = vector.load %arg25[%c0_17, %c0_18] : memref<16x128xbf16, #tpu.memory_space<vmem>>, vector<16x128xbf16>
    tpu.vector_store %arg25[%c0_17, %c0_18], %22 {strides = array<i32>} : memref<16x128xbf16, #tpu.memory_space<vmem>>, vector<16x128xbf16>,
    %24 = arith.truncf %16 : vector<8x128xf32> to vector<8x128xbf16>
    %c0_19 = arith.constant 0 : index
    %c0_20 = arith.constant 0 : index
    %25 = vector.load %arg25[%c0_19, %c0_20] : memref<16x128xbf16, #tpu.memory_space<vmem>>, vector<8x128xbf16>
    tpu.vector_store %arg25[%c0_19, %c0_20], %24 {strides = array<i32>} : memref<16x128xbf16, #tpu.memory_space<vmem>>, vector<8x128xbf16>,
    %26 = arith.truncf %21 : vector<4x128xf32> to vector<4x128xbf16>
    %c8 = arith.constant 8 : index
    %c0_21 = arith.constant 0 : index
    %27 = vector.load %arg25[%c8, %c0_21] : memref<16x128xbf16, #tpu.memory_space<vmem>>, vector<4x128xbf16>
    tpu.vector_store %arg25[%c8, %c0_21], %26 {strides = array<i32>} : memref<16x128xbf16, #tpu.memory_space<vmem>>, vector<4x128xbf16>,
    %c0_22 = arith.constant 0 : index
    %c0_23 = arith.constant 0 : index
    %28 = vector.load %arg25[%c0_22, %c0_23] : memref<16x128xbf16, #tpu.memory_space<vmem>>, vector<16x128xbf16>
    %c0_24 = arith.constant 0 : index
    %c0_25 = arith.constant 0 : index
    %29 = vector.load %arg6[%c0_24, %c0_25] : memref<2x16xi32, #tpu.memory_space<vmem>>, vector<1x16xi32>
    %c1 = arith.constant 1 : index
    %c0_26 = arith.constant 0 : index
    %30 = vector.load %arg6[%c1, %c0_26] : memref<2x16xi32, #tpu.memory_space<vmem>>, vector<1x16xi32>
    %31 = tpu.iota {dimensions = array<i32: 0>} : vector<16x16xi32>
    %32 = vector.broadcast %29 : vector<1x16xi32> to vector<16x16xi32>
    %33 = arith.cmpi eq, %31, %32 : vector<16x16xi32>
    %cst_27 = arith.constant 1.000000e+00 : f32
    %cst_28 = arith.constant 0.000000e+00 : f32
    %34 = vector.broadcast %cst_27 : f32 to vector<16x16xf32>
    %35 = vector.broadcast %cst_28 : f32 to vector<16x16xf32>
    %36 = arith.select %33, %34, %35 : vector<16x16xi1>, vector<16x16xf32>
    %37 = arith.truncf %36 : vector<16x16xf32> to vector<16x16xbf16>
    %38 = vector.broadcast %30 : vector<1x16xi32> to vector<16x16xi32>
    %39 = arith.cmpi eq, %31, %38 : vector<16x16xi32>
    %cst_29 = arith.constant 1.000000e+00 : f32
    %cst_30 = arith.constant 0.000000e+00 : f32
    %40 = vector.broadcast %cst_29 : f32 to vector<16x16xf32>
    %41 = vector.broadcast %cst_30 : f32 to vector<16x16xf32>
    %42 = arith.select %39, %40, %41 : vector<16x16xi1>, vector<16x16xf32>
    %43 = arith.truncf %42 : vector<16x16xf32> to vector<16x16xbf16>
    %cst_31 = arith.constant dense<0.000000e+00> : vector<16xf32>
    %44 = vector.multi_reduction <add>, %42, %cst_31 [1] : vector<16x16xf32> to vector<16xf32>
    %45 = vector.shape_cast %44 : vector<16xf32> to vector<16x1xf32>
    %cst_32 = arith.constant 1.000000e+00 : f32
    %46 = vector.broadcast %cst_32 : f32 to vector<16x1xf32>
    %47 = arith.maximumf %45, %46 : vector<16x1xf32>
    %48 = tpu.reciprocal %47 : vector<16x1xf32> -> vector<16x1xf32>
    %c0_33 = arith.constant 0 : index
    %c0_34 = arith.constant 0 : index
    %49 = vector.load %arg7[%c0_33, %c0_34] : memref<16x128xbf16, #tpu.memory_space<vmem>>, vector<16x128xbf16>
    %cst_35 = arith.constant dense<0.000000e+00> : vector<16x128xf32>
    %50 = tpu.matmul %37, %28, %cst_35 {dimension_numbers = #tpu.dot_dimension_numbers<[0], [0], [1], [1], [0, 1, 1, 1], [], []>} : vector<16x16xbf16>, vector<16x128xbf16>, vector<16x128xf32> -> vector<16x128xf32>
    %51 = arith.truncf %50 : vector<16x128xf32> to vector<16x128xbf16>
    %52 = tpu.concatenate %51, %49 in 1 : vector<16x128xbf16>, vector<16x128xbf16> -> vector<16x256xbf16>
    %c0_36 = arith.constant 0 : index
    %c0_37 = arith.constant 0 : index
    %53 = vector.load %arg8[%c0_36, %c0_37] : memref<256x128xbf16, #tpu.memory_space<vmem>>, vector<256x128xbf16>
    %cst_38 = arith.constant dense<0.000000e+00> : vector<16x128xf32>
    %54 = tpu.matmul %52, %53, %cst_38 {dimension_numbers = #tpu.dot_dimension_numbers<[1], [0], [0], [1], [0, 0, 1, 1], [], []>} : vector<16x256xbf16>, vector<256x128xbf16>, vector<16x128xf32> -> vector<16x128xf32>
    %c0_39 = arith.constant 0 : index
    %c0_40 = arith.constant 0 : index
    %55 = vector.load %arg9[%c0_39, %c0_40] : memref<1x128xf32, #tpu.memory_space<vmem>>, vector<1x128xf32>
    %56 = vector.broadcast %55 : vector<1x128xf32> to vector<16x128xf32>
    %57 = arith.addf %54, %56 : vector<16x128xf32>
    %cst_41 = arith.constant 0.000000e+00 : f32
    %58 = vector.broadcast %cst_41 : f32 to vector<16x128xf32>
    %59 = arith.maximumf %57, %58 : vector<16x128xf32>
    %60 = arith.truncf %59 : vector<16x128xf32> to vector<16x128xbf16>
    %cst_42 = arith.constant dense<0.000000e+00> : vector<16x128xf32>
    %61 = tpu.matmul %43, %60, %cst_42 {dimension_numbers = #tpu.dot_dimension_numbers<[1], [0], [0], [1], [0, 0, 1, 1], [], []>} : vector<16x16xbf16>, vector<16x128xbf16>, vector<16x128xf32> -> vector<16x128xf32>
    %62 = vector.broadcast %48 : vector<16x1xf32> to vector<16x128xf32>
    %63 = arith.mulf %61, %62 : vector<16x128xf32>
    %64 = arith.truncf %63 : vector<16x128xf32> to vector<16x128xbf16>
    %65 = tpu.concatenate %64, %28 in 1 : vector<16x128xbf16>, vector<16x128xbf16> -> vector<16x256xbf16>
    %c0_43 = arith.constant 0 : index
    %c0_44 = arith.constant 0 : index
    %66 = vector.load %arg10[%c0_43, %c0_44] : memref<256x128xbf16, #tpu.memory_space<vmem>>, vector<256x128xbf16>
    %cst_45 = arith.constant dense<0.000000e+00> : vector<16x128xf32>
    %67 = tpu.matmul %65, %66, %cst_45 {dimension_numbers = #tpu.dot_dimension_numbers<[1], [0], [0], [1], [0, 0, 1, 1], [], []>} : vector<16x256xbf16>, vector<256x128xbf16>, vector<16x128xf32> -> vector<16x128xf32>
    %c0_46 = arith.constant 0 : index
    %c0_47 = arith.constant 0 : index
    %68 = vector.load %arg11[%c0_46, %c0_47] : memref<1x128xf32, #tpu.memory_space<vmem>>, vector<1x128xf32>
    %69 = vector.broadcast %68 : vector<1x128xf32> to vector<16x128xf32>
    %70 = arith.addf %67, %69 : vector<16x128xf32>
    %cst_48 = arith.constant 0.000000e+00 : f32
    %71 = vector.broadcast %cst_48 : f32 to vector<16x128xf32>
    %72 = arith.maximumf %70, %71 : vector<16x128xf32>
    %73 = arith.mulf %72, %72 : vector<16x128xf32>
    %cst_49 = arith.constant dense<0.000000e+00> : vector<16xf32>
    %74 = vector.multi_reduction <add>, %73, %cst_49 [1] : vector<16x128xf32> to vector<16xf32>
    %75 = vector.shape_cast %74 : vector<16xf32> to vector<16x1xf32>
    %cst_50 = arith.constant 1.000000e-24 : f32
    %76 = vector.broadcast %cst_50 : f32 to vector<16x1xf32>
    %77 = arith.maximumf %75, %76 : vector<16x1xf32>
    %78 = math.rsqrt %77 : vector<16x1xf32>
    %79 = vector.broadcast %78 : vector<16x1xf32> to vector<16x128xf32>
    %80 = arith.mulf %72, %79 : vector<16x128xf32>
    %81 = arith.truncf %80 : vector<16x128xf32> to vector<16x128xbf16>
    %cst_51 = arith.constant dense<0.000000e+00> : vector<16x128xf32>
    %82 = tpu.matmul %37, %81, %cst_51 {dimension_numbers = #tpu.dot_dimension_numbers<[0], [0], [1], [1], [0, 1, 1, 1], [], []>} : vector<16x16xbf16>, vector<16x128xbf16>, vector<16x128xf32> -> vector<16x128xf32>
    %83 = arith.truncf %82 : vector<16x128xf32> to vector<16x128xbf16>
    %cst_52 = arith.constant dense<0.000000e+00> : vector<16x128xf32>
    %84 = tpu.matmul %43, %81, %cst_52 {dimension_numbers = #tpu.dot_dimension_numbers<[0], [0], [1], [1], [0, 1, 1, 1], [], []>} : vector<16x16xbf16>, vector<16x128xbf16>, vector<16x128xf32> -> vector<16x128xf32>
    %85 = arith.truncf %84 : vector<16x128xf32> to vector<16x128xbf16>
    %86 = tpu.concatenate %83, %85, %49 in 1 : vector<16x128xbf16>, vector<16x128xbf16>, vector<16x128xbf16> -> vector<16x384xbf16>
    %c0_53 = arith.constant 0 : index
    %c0_54 = arith.constant 0 : index
    %87 = vector.load %arg12[%c0_53, %c0_54] : memref<384x128xbf16, #tpu.memory_space<vmem>>, vector<384x128xbf16>
    %cst_55 = arith.constant dense<0.000000e+00> : vector<16x128xf32>
    %88 = tpu.matmul %86, %87, %cst_55 {dimension_numbers = #tpu.dot_dimension_numbers<[1], [0], [0], [1], [0, 0, 1, 1], [], []>} : vector<16x384xbf16>, vector<384x128xbf16>, vector<16x128xf32> -> vector<16x128xf32>
    %c0_56 = arith.constant 0 : index
    %c0_57 = arith.constant 0 : index
    %89 = vector.load %arg13[%c0_56, %c0_57] : memref<1x128xf32, #tpu.memory_space<vmem>>, vector<1x128xf32>
    %90 = vector.broadcast %89 : vector<1x128xf32> to vector<16x128xf32>
    %91 = arith.addf %88, %90 : vector<16x128xf32>
    %cst_58 = arith.constant 0.000000e+00 : f32
    %92 = vector.broadcast %cst_58 : f32 to vector<16x128xf32>
    %93 = arith.maximumf %91, %92 : vector<16x128xf32>
    %94 = arith.truncf %93 : vector<16x128xf32> to vector<16x128xbf16>
    %cst_59 = arith.constant dense<0.000000e+00> : vector<16x128xf32>
    %95 = tpu.matmul %37, %81, %cst_59 {dimension_numbers = #tpu.dot_dimension_numbers<[0], [0], [1], [1], [0, 1, 1, 1], [], []>} : vector<16x16xbf16>, vector<16x128xbf16>, vector<16x128xf32> -> vector<16x128xf32>
    %96 = arith.truncf %95 : vector<16x128xf32> to vector<16x128xbf16>
    %97 = tpu.concatenate %96, %94 in 1 : vector<16x128xbf16>, vector<16x128xbf16> -> vector<16x256xbf16>
    %c0_60 = arith.constant 0 : index
    %c0_61 = arith.constant 0 : index
    %98 = vector.load %arg14[%c0_60, %c0_61] : memref<256x128xbf16, #tpu.memory_space<vmem>>, vector<256x128xbf16>
    %cst_62 = arith.constant dense<0.000000e+00> : vector<16x128xf32>
    %99 = tpu.matmul %97, %98, %cst_62 {dimension_numbers = #tpu.dot_dimension_numbers<[1], [0], [0], [1], [0, 0, 1, 1], [], []>} : vector<16x256xbf16>, vector<256x128xbf16>, vector<16x128xf32> -> vector<16x128xf32>
    %c0_63 = arith.constant 0 : index
    %c0_64 = arith.constant 0 : index
    %100 = vector.load %arg15[%c0_63, %c0_64] : memref<1x128xf32, #tpu.memory_space<vmem>>, vector<1x128xf32>
    %101 = vector.broadcast %100 : vector<1x128xf32> to vector<16x128xf32>
    %102 = arith.addf %99, %101 : vector<16x128xf32>
    %cst_65 = arith.constant 0.000000e+00 : f32
    %103 = vector.broadcast %cst_65 : f32 to vector<16x128xf32>
    %104 = arith.maximumf %102, %103 : vector<16x128xf32>
    %105 = arith.truncf %104 : vector<16x128xf32> to vector<16x128xbf16>
    %cst_66 = arith.constant dense<0.000000e+00> : vector<16x128xf32>
    %106 = tpu.matmul %43, %105, %cst_66 {dimension_numbers = #tpu.dot_dimension_numbers<[1], [0], [0], [1], [0, 0, 1, 1], [], []>} : vector<16x16xbf16>, vector<16x128xbf16>, vector<16x128xf32> -> vector<16x128xf32>
    %107 = vector.broadcast %48 : vector<16x1xf32> to vector<16x128xf32>
    %108 = arith.mulf %106, %107 : vector<16x128xf32>
    %109 = arith.truncf %108 : vector<16x128xf32> to vector<16x128xbf16>
    %110 = tpu.concatenate %109, %81 in 1 : vector<16x128xbf16>, vector<16x128xbf16> -> vector<16x256xbf16>
    %c0_67 = arith.constant 0 : index
    %c0_68 = arith.constant 0 : index
    %111 = vector.load %arg16[%c0_67, %c0_68] : memref<256x128xbf16, #tpu.memory_space<vmem>>, vector<256x128xbf16>
    %cst_69 = arith.constant dense<0.000000e+00> : vector<16x128xf32>
    %112 = tpu.matmul %110, %111, %cst_69 {dimension_numbers = #tpu.dot_dimension_numbers<[1], [0], [0], [1], [0, 0, 1, 1], [], []>} : vector<16x256xbf16>, vector<256x128xbf16>, vector<16x128xf32> -> vector<16x128xf32>
    %c0_70 = arith.constant 0 : index
    %c0_71 = arith.constant 0 : index
    %113 = vector.load %arg17[%c0_70, %c0_71] : memref<1x128xf32, #tpu.memory_space<vmem>>, vector<1x128xf32>
    %114 = vector.broadcast %113 : vector<1x128xf32> to vector<16x128xf32>
    %115 = arith.addf %112, %114 : vector<16x128xf32>
    %cst_72 = arith.constant 0.000000e+00 : f32
    %116 = vector.broadcast %cst_72 : f32 to vector<16x128xf32>
    %117 = arith.maximumf %115, %116 : vector<16x128xf32>
    %118 = arith.mulf %117, %117 : vector<16x128xf32>
    %cst_73 = arith.constant dense<0.000000e+00> : vector<16xf32>
    %119 = vector.multi_reduction <add>, %118, %cst_73 [1] : vector<16x128xf32> to vector<16xf32>
    %120 = vector.shape_cast %119 : vector<16xf32> to vector<16x1xf32>
    %cst_74 = arith.constant 1.000000e-24 : f32
    %121 = vector.broadcast %cst_74 : f32 to vector<16x1xf32>
    %122 = arith.maximumf %120, %121 : vector<16x1xf32>
    %123 = math.rsqrt %122 : vector<16x1xf32>
    %124 = vector.broadcast %123 : vector<16x1xf32> to vector<16x128xf32>
    %125 = arith.mulf %117, %124 : vector<16x128xf32>
    %126 = arith.truncf %125 : vector<16x128xf32> to vector<16x128xbf16>
    %c0_75 = arith.constant 0 : index
    %c0_76 = arith.constant 0 : index
    %127 = vector.load %arg20[%c0_75, %c0_76] : memref<128x128xbf16, #tpu.memory_space<vmem>>, vector<128x128xbf16>
    %cst_77 = arith.constant dense<0.000000e+00> : vector<16x128xf32>
    %128 = tpu.matmul %126, %127, %cst_77 {dimension_numbers = #tpu.dot_dimension_numbers<[1], [0], [0], [1], [0, 0, 1, 1], [], []>} : vector<16x128xbf16>, vector<128x128xbf16>, vector<16x128xf32> -> vector<16x128xf32>
    %c0_78 = arith.constant 0 : index
    %c0_79 = arith.constant 0 : index
    %129 = vector.load %arg21[%c0_78, %c0_79] : memref<1x128xf32, #tpu.memory_space<vmem>>, vector<1x128xf32>
    %130 = vector.broadcast %129 : vector<1x128xf32> to vector<16x128xf32>
    %131 = arith.addf %128, %130 : vector<16x128xf32>
    %cst_80 = arith.constant 0.000000e+00 : f32
    %132 = vector.broadcast %cst_80 : f32 to vector<16x128xf32>
    %133 = arith.maximumf %131, %132 : vector<16x128xf32>
    %c0_81 = arith.constant 0 : index
    %c0_82 = arith.constant 0 : index
    %134 = vector.load %arg22[%c0_81, %c0_82] : memref<128x128xbf16, #tpu.memory_space<vmem>>, vector<128x128xbf16>
    %135 = arith.truncf %133 : vector<16x128xf32> to vector<16x128xbf16>
    %cst_83 = arith.constant dense<0.000000e+00> : vector<16x128xf32>
    %136 = tpu.matmul %135, %134, %cst_83 {dimension_numbers = #tpu.dot_dimension_numbers<[1], [0], [0], [1], [0, 0, 1, 1], [], []>} : vector<16x128xbf16>, vector<128x128xbf16>, vector<16x128xf32> -> vector<16x128xf32>
    %c0_84 = arith.constant 0 : index
    %c0_85 = arith.constant 0 : index
    %137 = vector.load %arg23[%c0_84, %c0_85] : memref<1x128xf32, #tpu.memory_space<vmem>>, vector<1x128xf32>
    %138 = vector.broadcast %137 : vector<1x128xf32> to vector<16x128xf32>
    %139 = arith.addf %136, %138 : vector<16x128xf32>
    %c0_86 = arith.constant 0 : index
    %c0_87 = arith.constant 0 : index
    %140 = vector.load %arg24[%c0_86, %c0_87] : memref<16x128xf32, #tpu.memory_space<vmem>>, vector<16x128xf32>
    tpu.vector_store %arg24[%c0_86, %c0_87], %139 {strides = array<i32>} : memref<16x128xf32, #tpu.memory_space<vmem>>, vector<16x128xf32>,
    return
  }
}

</mosaic_0001>

<llo_original>
// kernel: tpu_custom_call.1
$region0: #{tpu_custom_call.1}
  #allocation0 [shape = 'u32[]', space=smem, size = 0x4, offset = 0x4, fixed_abs, tag = 'smem constant byte address 0x4 - core index']
  #allocation1 [shape = 'u32[144,128]{1,0:T(1,128)}', space=vmem, size = 0x12000, scoped, tag = 'internal scratch']
  #allocation2 [shape = 'bf16[16,128]{1,0:T(16,128)(2,1)}', space=vmem, size = 0x1000, scoped, tag = 'scratch operand']
  %s0 = inlined_call_operand.vmem [shape: f32[8,4], index: 0, kind: input, shape index: {}]
  %s1 = inlined_call_operand.vmem [shape: bf16[4,128], index: 1, kind: input, shape index: {}]
  %s2 = inlined_call_operand.hbm [shape: bf16[128,128], index: 2, kind: input, shape index: {}]
  %s3 = inlined_call_operand.vmem [shape: f32[1,128], index: 3, kind: input, shape index: {}]
  %s4 = inlined_call_operand.hbm [shape: bf16[128,128], index: 4, kind: input, shape index: {}]
  %s5 = inlined_call_operand.vmem [shape: f32[1,128], index: 5, kind: input, shape index: {}]
  %s6 = inlined_call_operand.vmem [shape: s32[2,16], index: 6, kind: input, shape index: {}]
  %s7 = inlined_call_operand.vmem [shape: bf16[16,128], index: 7, kind: input, shape index: {}]
  %s8 = inlined_call_operand.hbm [shape: bf16[256,128], index: 8, kind: input, shape index: {}]
  %s9 = inlined_call_operand.vmem [shape: f32[1,128], index: 9, kind: input, shape index: {}]
  %s10 = inlined_call_operand.hbm [shape: bf16[256,128], index: 10, kind: input, shape index: {}]
  %s11 = inlined_call_operand.vmem [shape: f32[1,128], index: 11, kind: input, shape index: {}]
  %s12 = inlined_call_operand.hbm [shape: bf16[384,128], index: 12, kind: input, shape index: {}]
  %s13 = inlined_call_operand.vmem [shape: f32[1,128], index: 13, kind: input, shape index: {}]
  %s14 = inlined_call_operand.hbm [shape: bf16[256,128], index: 14, kind: input, shape index: {}]
  %s15 = inlined_call_operand.vmem [shape: f32[1,128], index: 15, kind: input, shape index: {}]
  %s16 = inlined_call_operand.hbm [shape: bf16[256,128], index: 16, kind: input, shape index: {}]
  %s17 = inlined_call_operand.vmem [shape: f32[1,128], index: 17, kind: input, shape index: {}]
  %s18 = inlined_call_operand.hbm [shape: bf16[384,128], index: 18, kind: input, shape index: {}]
  %s19 = inlined_call_operand.vmem [shape: f32[1,128], index: 19, kind: input, shape index: {}]
  %s20 = inlined_call_operand.vmem [shape: bf16[128,128], index: 20, kind: input, shape index: {}]
  %s21 = inlined_call_operand.vmem [shape: f32[1,128], index: 21, kind: input, shape index: {}]
  %s22 = inlined_call_operand.hbm [shape: bf16[128,128], index: 22, kind: input, shape index: {}]
  %s23 = inlined_call_operand.vmem [shape: f32[1,128], index: 23, kind: input, shape index: {}]
  %s24 = inlined_call_operand.hbm [shape: f32[16,128], index: 24, kind: output, shape index: {}]
  %s25 = sld [smem:[#allocation0]]
  $region142: #{tpu_custom_call.1} parent=0
    _
  %s27 = ssub.s32 1, %s25
  %s28 = scalar_select 0, %s27, %s25
  $region1: #{tpu_custom_call.1} parent=0
    #allocation3 [shape = 'u8[32768]{0}', space=vmem, size = 0x8000, scoped, tag = 'input window, operand 2, single buffered']
    #allocation4 [shape = 's32[1]{0}', space=sflag, size = 0x4, scoped, tag = 'scoped memory for tpu_custom_call.1']
    #allocation5 [shape = 's32[1]{0}', space=sflag, size = 0x4, scoped, tag = 'scoped memory for tpu_custom_call.1']
    #allocation6 [shape = 'u8[32768]{0}', space=vmem, size = 0x8000, scoped, tag = 'input window, operand 4, single buffered']
    #allocation7 [shape = 's32[1]{0}', space=sflag, size = 0x4, scoped, tag = 'scoped memory for tpu_custom_call.1']
    #allocation8 [shape = 'u8[65536]{0}', space=vmem, size = 0x10000, scoped, tag = 'input window, operand 8, single buffered']
    #allocation9 [shape = 'u8[65536]{0}', space=vmem, size = 0x10000, scoped, tag = 'input window, operand 10, single buffered']
    #allocation10 [shape = 's32[1]{0}', space=sflag, size = 0x4, scoped, tag = 'scoped memory for tpu_custom_call.1']
    #allocation11 [shape = 'u8[98304]{0}', space=vmem, size = 0x18000, scoped, tag = 'input window, operand 12, single buffered']
    #allocation12 [shape = 'u8[65536]{0}', space=vmem, size = 0x10000, scoped, tag = 'input window, operand 14, single buffered']
    #allocation13 [shape = 's32[1]{0}', space=sflag, size = 0x4, scoped, tag = 'scoped memory for tpu_custom_call.1']
    #allocation14 [shape = 'u8[65536]{0}', space=vmem, size = 0x10000, scoped, tag = 'input window, operand 16, single buffered']
    #allocation15 [shape = 'u8[98304]{0}', space=vmem, size = 0x18000, scoped, tag = 'input window, operand 18, single buffered']
    #allocation16 [shape = 's32[1]{0}', space=sflag, size = 0x4, scoped, tag = 'scoped memory for tpu_custom_call.1']
    #allocation17 [shape = 'u8[32768]{0}', space=vmem, size = 0x8000, scoped, tag = 'input window, operand 22, single buffered']
    #allocation18 [shape = 'u8[8192]{0}', space=vmem, size = 0x2000, scoped, tag = 'output window, operand 0, single buffered']
    %29 = vsyncpa [#allocation4], 0
    %30 = vsyncpa [#allocation7], 0
    %31 = vsyncpa [#allocation10], 0
    %32 = vsyncpa [#allocation13], 0
    %33 = vsyncpa [#allocation16], 0
    %34 = vsyncpa [#allocation5], 0
    // Predicated region
    $region2: #{tpu_custom_call.1} parent=1 // pred_check
      _
    $region3: #{tpu_custom_call.1} parent=1 // pred_check_branch
      %36 = sbr.rel (0) target = $region5
    $region4: #{tpu_custom_call.1} parent=1 // pred_region
      _
    $region5: #{tpu_custom_call.1} parent=1 // pred_fallthru
      _
    // Predicated region
    $region6: #{tpu_custom_call.1} parent=1 // pred_check
      _
    $region7: #{tpu_custom_call.1} parent=1 // pred_check_branch
      %38 = sbr.rel (0) target = $region9
    $region8: #{tpu_custom_call.1} parent=1 // pred_region
      _
    $region9: #{tpu_custom_call.1} parent=1 // pred_fallthru
      _
    // Predicated region
    $region10: #{tpu_custom_call.1} parent=1 // pred_check
      _
    $region11: #{tpu_custom_call.1} parent=1 // pred_check_branch
      %40 = sbr.rel (0) target = $region13
    $region12: #{tpu_custom_call.1} parent=1 // pred_region
      %s42 = ssub.s32 1024, 1024
      %43 = vsyncadd [#allocation4], %s42
      %s44 = sshll.u32 [#allocation3], 4
      %s45 = int_to_ptr.vmem [resolvable:$true] %s44
      %50 = dma.hbm_to_vmem [thread:$0]  %s2, 1024, %s45, [#allocation4], 64, 64, 4
    $region13: #{tpu_custom_call.1} parent=1 // pred_fallthru
      _
    // Predicated region
    $region14: #{tpu_custom_call.1} parent=1 // pred_check
      _
    $region15: #{tpu_custom_call.1} parent=1 // pred_check_branch
      %52 = sbr.rel (0) target = $region17
    $region16: #{tpu_custom_call.1} parent=1 // pred_region
      _
    $region17: #{tpu_custom_call.1} parent=1 // pred_fallthru
      _
    // Predicated region
    $region18: #{tpu_custom_call.1} parent=1 // pred_check
      _
    $region19: #{tpu_custom_call.1} parent=1 // pred_check_branch
      %54 = sbr.rel (0) target = $region21
    $region20: #{tpu_custom_call.1} parent=1 // pred_region
      %s56 = ssub.s32 1024, 1024
      %57 = vsyncadd [#allocation7], %s56
      %s58 = sshll.u32 [#allocation6], 4
      %s59 = int_to_ptr.vmem [resolvable:$true] %s58
      %64 = dma.hbm_to_vmem [thread:$0]  %s4, 1024, %s59, [#allocation7], 64, 64, 4
    $region21: #{tpu_custom_call.1} parent=1 // pred_fallthru
      _
    // Predicated region
    $region22: #{tpu_custom_call.1} parent=1 // pred_check
      _
    $region23: #{tpu_custom_call.1} parent=1 // pred_check_branch
      %66 = sbr.rel (0) target = $region25
    $region24: #{tpu_custom_call.1} parent=1 // pred_region
      _
    $region25: #{tpu_custom_call.1} parent=1 // pred_fallthru
      _
    // Predicated region
    $region26: #{tpu_custom_call.1} parent=1 // pred_check
      _
    $region27: #{tpu_custom_call.1} parent=1 // pred_check_branch
      %68 = sbr.rel (0) target = $region29
    $region28: #{tpu_custom_call.1} parent=1 // pred_region
      _
    $region29: #{tpu_custom_call.1} parent=1 // pred_fallthru
      _
    // Predicated region
    $region30: #{tpu_custom_call.1} parent=1 // pred_check
      _
    $region31: #{tpu_custom_call.1} parent=1 // pred_check_branch
      %70 = sbr.rel (0) target = $region33
    $region32: #{tpu_custom_call.1} parent=1 // pred_region
      _
    $region33: #{tpu_custom_call.1} parent=1 // pred_fallthru
      _
    // Predicated region
    $region34: #{tpu_custom_call.1} parent=1 // pred_check
      _
    $region35: #{tpu_custom_call.1} parent=1 // pred_check_branch
      %72 = sbr.rel (0) target = $region37
    $region36: #{tpu_custom_call.1} parent=1 // pred_region
      %s74 = ssub.s32 2048, 2048
      %75 = vsyncadd [#allocation7], %s74
      %s76 = sshll.u32 [#allocation8], 4
      %s77 = int_to_ptr.vmem [resolvable:$true] %s76
      %82 = dma.hbm_to_vmem [thread:$0]  %s8, 2048, %s77, [#allocation7], 64, 64, 4
    $region37: #{tpu_custom_call.1} parent=1 // pred_fallthru
      _
    // Predicated region
    $region38: #{tpu_custom_call.1} parent=1 // pred_check
      _
    $region39: #{tpu_custom_call.1} parent=1 // pred_check_branch
      %84 = sbr.rel (0) target = $region41
    $region40: #{tpu_custom_call.1} parent=1 // pred_region
      _
    $region41: #{tpu_custom_call.1} parent=1 // pred_fallthru
      _
    // Predicated region
    $region42: #{tpu_custom_call.1} parent=1 // pred_check
      _
    $region43: #{tpu_custom_call.1} parent=1 // pred_check_branch
      %86 = sbr.rel (0) target = $region45
    $region44: #{tpu_custom_call.1} parent=1 // pred_region
      %s88 = ssub.s32 2048, 2048
      %89 = vsyncadd [#allocation10], %s88
      %s90 = sshll.u32 [#allocation9], 4
      %s91 = int_to_ptr.vmem [resolvable:$true] %s90
      %96 = dma.hbm_to_vmem [thread:$0]  %s10, 2048, %s91, [#allocation10], 64, 64, 4
    $region45: #{tpu_custom_call.1} parent=1 // pred_fallthru
      _
    // Predicated region
    $region46: #{tpu_custom_call.1} parent=1 // pred_check
      _
    $region47: #{tpu_custom_call.1} parent=1 // pred_check_branch
      %98 = sbr.rel (0) target = $region49
    $region48: #{tpu_custom_call.1} parent=1 // pred_region
      _
    $region49: #{tpu_custom_call.1} parent=1 // pred_fallthru
      _
    // Predicated region
    $region50: #{tpu_custom_call.1} parent=1 // pred_check
      _
    $region51: #{tpu_custom_call.1} parent=1 // pred_check_branch
      %100 = sbr.rel (0) target = $region53
    $region52: #{tpu_custom_call.1} parent=1 // pred_region
      %s102 = ssub.s32 3072, 3072
      %103 = vsyncadd [#allocation10], %s102
      %s104 = sshll.u32 [#allocation11], 4
      %s105 = int_to_ptr.vmem [resolvable:$true] %s104
      %110 = dma.hbm_to_vmem [thread:$0]  %s12, 3072, %s105, [#allocation10], 64, 64, 4
    $region53: #{tpu_custom_call.1} parent=1 // pred_fallthru
      _
    // Predicated region
    $region54: #{tpu_custom_call.1} parent=1 // pred_check
      _
    $region55: #{tpu_custom_call.1} parent=1 // pred_check_branch
      %112 = sbr.rel (0) target = $region57
    $region56: #{tpu_custom_call.1} parent=1 // pred_region
      _
    $region57: #{tpu_custom_call.1} parent=1 // pred_fallthru
      _
    // Predicated region
    $region58: #{tpu_custom_call.1} parent=1 // pred_check
      _
    $region59: #{tpu_custom_call.1} parent=1 // pred_check_branch
      %114 = sbr.rel (0) target = $region61
    $region60: #{tpu_custom_call.1} parent=1 // pred_region
      %s116 = ssub.s32 2048, 2048
      %117 = vsyncadd [#allocation13], %s116
      %s118 = sshll.u32 [#allocation12], 4
      %s119 = int_to_ptr.vmem [resolvable:$true] %s118
      %124 = dma.hbm_to_vmem [thread:$0]  %s14, 2048, %s119, [#allocation13], 64, 64, 4
    $region61: #{tpu_custom_call.1} parent=1 // pred_fallthru
      _
    // Predicated region
    $region62: #{tpu_custom_call.1} parent=1 // pred_check
      _
    $region63: #{tpu_custom_call.1} parent=1 // pred_check_branch
      %126 = sbr.rel (0) target = $region65
    $region64: #{tpu_custom_call.1} parent=1 // pred_region
      _
    $region65: #{tpu_custom_call.1} parent=1 // pred_fallthru
      _
    // Predicated region
    $region66: #{tpu_custom_call.1} parent=1 // pred_check
      _
    $region67: #{tpu_custom_call.1} parent=1 // pred_check_branch
      %128 = sbr.rel (0) target = $region69
    $region68: #{tpu_custom_call.1} parent=1 // pred_region
      %s130 = ssub.s32 2048, 2048
      %131 = vsyncadd [#allocation13], %s130
      %s132 = sshll.u32 [#allocation14], 4
      %s133 = int_to_ptr.vmem [resolvable:$true] %s132
      %138 = dma.hbm_to_vmem [thread:$0]  %s16, 2048, %s133, [#allocation13], 64, 64, 4
    $region69: #{tpu_custom_call.1} parent=1 // pred_fallthru
      _
    // Predicated region
    $region70: #{tpu_custom_call.1} parent=1 // pred_check
      _
    $region71: #{tpu_custom_call.1} parent=1 // pred_check_branch
      %140 = sbr.rel (0) target = $region73
    $region72: #{tpu_custom_call.1} parent=1 // pred_region
      _
    $region73: #{tpu_custom_call.1} parent=1 // pred_fallthru
      _
    // Predicated region
    $region74: #{tpu_custom_call.1} parent=1 // pred_check
      _
    $region75: #{tpu_custom_call.1} parent=1 // pred_check_branch
      %142 = sbr.rel (0) target = $region77
    $region76: #{tpu_custom_call.1} parent=1 // pred_region
      %s144 = ssub.s32 3072, 3072
      %145 = vsyncadd [#allocation16], %s144
      %s146 = sshll.u32 [#allocation15], 4
      %s147 = int_to_ptr.vmem [resolvable:$true] %s146
      %152 = dma.hbm_to_vmem [thread:$0]  %s18, 3072, %s147, [#allocation16], 64, 64, 4
    $region77: #{tpu_custom_call.1} parent=1 // pred_fallthru
      _
    // Predicated region
    $region78: #{tpu_custom_call.1} parent=1 // pred_check
      _
    $region79: #{tpu_custom_call.1} parent=1 // pred_check_branch
      %154 = sbr.rel (0) target = $region81
    $region80: #{tpu_custom_call.1} parent=1 // pred_region
      _
    $region81: #{tpu_custom_call.1} parent=1 // pred_fallthru
      _
    // Predicated region
    $region82: #{tpu_custom_call.1} parent=1 // pred_check
      _
    $region83: #{tpu_custom_call.1} parent=1 // pred_check_branch
      %156 = sbr.rel (0) target = $region85
    $region84: #{tpu_custom_call.1} parent=1 // pred_region
      _
    $region85: #{tpu_custom_call.1} parent=1 // pred_fallthru
      _
    // Predicated region
    $region86: #{tpu_custom_call.1} parent=1 // pred_check
      _
    $region87: #{tpu_custom_call.1} parent=1 // pred_check_branch
      %158 = sbr.rel (0) target = $region89
    $region88: #{tpu_custom_call.1} parent=1 // pred_region
      _
    $region89: #{tpu_custom_call.1} parent=1 // pred_fallthru
      _
    // Predicated region
    $region90: #{tpu_custom_call.1} parent=1 // pred_check
      _
    $region91: #{tpu_custom_call.1} parent=1 // pred_check_branch
      %160 = sbr.rel (0) target = $region93
    $region92: #{tpu_custom_call.1} parent=1 // pred_region
      %s162 = ssub.s32 1024, 1024
      %163 = vsyncadd [#allocation16], %s162
      %s164 = sshll.u32 [#allocation17], 4
      %s165 = int_to_ptr.vmem [resolvable:$true] %s164
      %170 = dma.hbm_to_vmem [thread:$0]  %s22, 1024, %s165, [#allocation16], 64, 64, 4
    $region93: #{tpu_custom_call.1} parent=1 // pred_fallthru
      _
    // Predicated region
    $region94: #{tpu_custom_call.1} parent=1 // pred_check
      _
    $region95: #{tpu_custom_call.1} parent=1 // pred_check_branch
      %172 = sbr.rel (0) target = $region97
    $region96: #{tpu_custom_call.1} parent=1 // pred_region
      _
    $region97: #{tpu_custom_call.1} parent=1 // pred_fallthru
      _
    // Predicated region
    $region98: #{tpu_custom_call.1} parent=1 // pred_check
      _
    $region99: #{tpu_custom_call.1} parent=1 // pred_check_branch
      %174 = sbr.rel (0) target = $region101
    $region100: #{tpu_custom_call.1} parent=1 // pred_region
      %175 = dma.done [#allocation4], 1024
    $region101: #{tpu_custom_call.1} parent=1 // pred_fallthru
      _
    // Predicated region
    $region102: #{tpu_custom_call.1} parent=1 // pred_check
      _
    $region103: #{tpu_custom_call.1} parent=1 // pred_check_branch
      %177 = sbr.rel (0) target = $region105
    $region104: #{tpu_custom_call.1} parent=1 // pred_region
      %178 = dma.done [#allocation7], 1024
    $region105: #{tpu_custom_call.1} parent=1 // pred_fallthru
      _
    // Predicated region
    $region106: #{tpu_custom_call.1} parent=1 // pred_check
      _
    $region107: #{tpu_custom_call.1} parent=1 // pred_check_branch
      %180 = sbr.rel (0) target = $region109
    $region108: #{tpu_custom_call.1} parent=1 // pred_region
      %181 = dma.done [#allocation7], 2048
    $region109: #{tpu_custom_call.1} parent=1 // pred_fallthru
      _
    // Predicated region
    $region110: #{tpu_custom_call.1} parent=1 // pred_check
      _
    $region111: #{tpu_custom_call.1} parent=1 // pred_check_branch
      %183 = sbr.rel (0) target = $region113
    $region112: #{tpu_custom_call.1} parent=1 // pred_region
      %184 = dma.done [#allocation10], 2048
    $region113: #{tpu_custom_call.1} parent=1 // pred_fallthru
      _
    // Predicated region
    $region114: #{tpu_custom_call.1} parent=1 // pred_check
      _
    $region115: #{tpu_custom_call.1} parent=1 // pred_check_branch
      %186 = sbr.rel (0) target = $region117
    $region116: #{tpu_custom_call.1} parent=1 // pred_region
      %187 = dma.done [#allocation10], 3072
    $region117: #{tpu_custom_call.1} parent=1 // pred_fallthru
      _
    // Predicated region
    $region118: #{tpu_custom_call.1} parent=1 // pred_check
      _
    $region119: #{tpu_custom_call.1} parent=1 // pred_check_branch
      %189 = sbr.rel (0) target = $region121
    $region120: #{tpu_custom_call.1} parent=1 // pred_region
      %190 = dma.done [#allocation13], 2048
    $region121: #{tpu_custom_call.1} parent=1 // pred_fallthru
      _
    // Predicated region
    $region122: #{tpu_custom_call.1} parent=1 // pred_check
      _
    $region123: #{tpu_custom_call.1} parent=1 // pred_check_branch
      %192 = sbr.rel (0) target = $region125
    $region124: #{tpu_custom_call.1} parent=1 // pred_region
      %193 = dma.done [#allocation13], 2048
    $region125: #{tpu_custom_call.1} parent=1 // pred_fallthru
      _
    // Predicated region
    $region126: #{tpu_custom_call.1} parent=1 // pred_check
      _
    $region127: #{tpu_custom_call.1} parent=1 // pred_check_branch
      %195 = sbr.rel (0) target = $region129
    $region128: #{tpu_custom_call.1} parent=1 // pred_region
      %196 = dma.done [#allocation16], 3072
    $region129: #{tpu_custom_call.1} parent=1 // pred_fallthru
      _
    // Predicated region
    $region130: #{tpu_custom_call.1} parent=1 // pred_check
      _
    $region131: #{tpu_custom_call.1} parent=1 // pred_check_branch
      %198 = sbr.rel (0) target = $region133
    $region132: #{tpu_custom_call.1} parent=1 // pred_region
      %199 = dma.done [#allocation16], 1024
    $region133: #{tpu_custom_call.1} parent=1 // pred_fallthru
      _
    %v201 = vld [vmem:[%s0] sm:$0xff]
    %v202 = vld [vmem:[%s1] sm:$0x3]
    %v203 = vpack.c.bf16 %v201, %v201
    %vm204 = vcmask 31744
    %v206 = vsel %vm204, %v203, 0
    %vm208 = vcmask 1041408
    %v210 = vsel %vm208, %v202, 0
    %212 = vmatprep.subr.bf16.mxu0 0
    %213 = vmatpush1.bf16.msra.mxu0 %v210
    %214 = vmatprep.subr.bf16.mxu0 0
    %215 = vmatpush1.bf16.msra.mxu0 0
    %216 = vmatprep.subr.bf16.mxu0 0
    %217 = vmatpush1.bf16.msra.mxu0 0
    %218 = vmatprep.subr.bf16.mxu0 0
    %219 = vmatpush1.bf16.msra.mxu0 0
    %220 = vmatprep.subr.bf16.mxu0 0
    %221 = vmatpush1.bf16.msra.mxu0 0
    %222 = vmatprep.subr.bf16.mxu0 0
    %223 = vmatpush1.bf16.msra.mxu0 0
    %224 = vmatprep.subr.bf16.mxu0 0
    %225 = vmatpush1.bf16.msra.mxu0 0
    %226 = vmatprep.subr.bf16.mxu0 0
    %227 = vmatpush1.bf16.msra.mxu0 0
    %228 = vmatprep.subr.bf16.mxu0 0
    %229 = vmatpush1.bf16.msra.mxu0 0
    %230 = vmatprep.subr.bf16.mxu0 0
    %231 = vmatpush1.bf16.msra.mxu0 0
    %232 = vmatprep.subr.bf16.mxu0 0
    %233 = vmatpush1.bf16.msra.mxu0 0
    %234 = vmatprep.subr.bf16.mxu0 0
    %235 = vmatpush1.bf16.msra.mxu0 0
    %236 = vmatprep.subr.bf16.mxu0 0
    %237 = vmatpush1.bf16.msra.mxu0 0
    %238 = vmatprep.subr.bf16.mxu0 0
    %239 = vmatpush1.bf16.msra.mxu0 0
    %240 = vmatprep.subr.bf16.mxu0 0
    %241 = vmatpush1.bf16.msra.mxu0 0
    %242 = vmatprep.subr.bf16.mxu0 0
    %243 = vmatpush1.bf16.msra.mxu0 0
    %244 = vmatprep.mubr.bf16.mxu0 0
    %245 = vmatmul.mubr.bf16.gmra.mrb[0].mxu0 %v206
    %v246 = vpop.f32.mrb[0].mxu0
    %v247 = vadd.f32 0.0, %v246
    %v248 = vpop.f32.mrb[0].mxu0
    %v249 = vpop.f32.mrb[0].mxu0
    %v250 = vpop.f32.mrb[0].mxu0
    %251 = vdwg.mxu0
    %v252 = vld [vmem:[#allocation3] sm:$0xf]
    %v253 = vld [vmem:[#allocation3 + $0x4] sm:$0xf]
    %v254 = vld [vmem:[#allocation3 + $0x8] sm:$0xf]
    %v255 = vld [vmem:[#allocation3 + $0xc] sm:$0xf]
    %v256 = vld [vmem:[#allocation3 + $0x10] sm:$0xf]
    %v257 = vld [vmem:[#allocation3 + $0x14] sm:$0xf]
    %v258 = vld [vmem:[#allocation3 + $0x18] sm:$0xf]
    %v259 = vld [vmem:[#allocation3 + $0x1c] sm:$0xf]
    %v260 = vld [vmem:[#allocation3 + $0x20] sm:$0xf]
    %v261 = vld [vmem:[#allocation3 + $0x24] sm:$0xf]
    %v262 = vld [vmem:[#allocation3 + $0x28] sm:$0xf]
    %v263 = vld [vmem:[#allocation3 + $0x2c] sm:$0xf]
    %v264 = vld [vmem:[#allocation3 + $0x30] sm:$0xf]
    %v265 = vld [vmem:[#allocation3 + $0x34] sm:$0xf]
    %v266 = vld [vmem:[#allocation3 + $0x38] sm:$0xf]
    %v267 = vld [vmem:[#allocation3 + $0x3c] sm:$0xf]
    %v268 = vpack.c.bf16 %v247, %v247
    %v269 = vld [vmem:[%s3] sm:$0x1]
    %v271 = vlaneseq
    %v272 = vshrl.u32 %v271, 7
    %v273 = vsub.s32 0, %v272
    %v274 = vrot.slane %v269, %v273
    %v292 = vunpack.c.l.b16 %v252
    %v293 = vunpack.c.l.b16 %v253
    %v294 = vunpack.c.l.b16 %v254
    %v295 = vunpack.c.l.b16 %v255
    %v296 = vunpack.c.l.b16 %v256
    %v297 = vunpack.c.l.b16 %v257
    %v298 = vunpack.c.l.b16 %v258
    %v299 = vunpack.c.l.b16 %v259
    %v300 = vunpack.c.l.b16 %v260
    %v301 = vunpack.c.l.b16 %v261
    %v302 = vunpack.c.l.b16 %v262
    %v303 = vunpack.c.l.b16 %v263
    %v304 = vunpack.c.l.b16 %v264
    %v305 = vunpack.c.l.b16 %v265
    %v306 = vunpack.c.l.b16 %v266
    %v307 = vunpack.c.l.b16 %v267
    %v308 = vpack.c.b16 %v293, %v292
    %v309 = vpack.c.b16 %v295, %v294
    %v310 = vpack.c.b16 %v297, %v296
    %v311 = vpack.c.b16 %v299, %v298
    %v312 = vpack.c.b16 %v301, %v300
    %v313 = vpack.c.b16 %v303, %v302
    %v314 = vpack.c.b16 %v305, %v304
    %v315 = vpack.c.b16 %v307, %v306
    %324 = vmatprep.subr.bf16.mxu0 0
    %325 = vmatpush1.bf16.msra.mxu0 %v308
    %326 = vmatprep.subr.bf16.mxu0 0
    %327 = vmatpush1.bf16.msra.mxu0 %v309
    %328 = vmatprep.subr.bf16.mxu0 0
    %329 = vmatpush1.bf16.msra.mxu0 %v310
    %330 = vmatprep.subr.bf16.mxu0 0
    %331 = vmatpush1.bf16.msra.mxu0 %v311
    %332 = vmatprep.subr.bf16.mxu0 0
    %333 = vmatpush1.bf16.msra.mxu0 %v312
    %334 = vmatprep.subr.bf16.mxu0 0
    %335 = vmatpush1.bf16.msra.mxu0 %v313
    %336 = vmatprep.subr.bf16.mxu0 0
    %337 = vmatpush1.bf16.msra.mxu0 %v314
    %338 = vmatprep.subr.bf16.mxu0 0
    %339 = vmatpush1.bf16.msra.mxu0 %v315
    %340 = vmatprep.subr.bf16.mxu0 0
    %341 = vmatpush1.bf16.msra.mxu0 0
    %342 = vmatprep.subr.bf16.mxu0 0
    %343 = vmatpush1.bf16.msra.mxu0 0
    %344 = vmatprep.subr.bf16.mxu0 0
    %345 = vmatpush1.bf16.msra.mxu0 0
    %346 = vmatprep.subr.bf16.mxu0 0
    %347 = vmatpush1.bf16.msra.mxu0 0
    %348 = vmatprep.subr.bf16.mxu0 0
    %349 = vmatpush1.bf16.msra.mxu0 0
    %350 = vmatprep.subr.bf16.mxu0 0
    %351 = vmatpush1.bf16.msra.mxu0 0
    %352 = vmatprep.subr.bf16.mxu0 0
    %353 = vmatpush1.bf16.msra.mxu0 0
    %354 = vmatprep.subr.bf16.mxu0 0
    %355 = vmatpush1.bf16.msra.mxu0 0
    %356 = vmatprep.mubr.bf16.mxu0 0
    %357 = vmatmul.mubr.bf16.gmra.mrb[0].mxu0 %v268
    %v358 = vpop.f32.mrb[0].mxu0
    %v359 = vadd.f32 %v274, %v358
    %v360 = vpop.f32.mrb[0].mxu0
    %v361 = vpop.f32.mrb[0].mxu0
    %v362 = vpop.f32.mrb[0].mxu0
    %363 = vdwg.mxu0
    %v364 = vmul.f32 %v359, 0.5
    %v365 = vtanh.pop %v364
    %v366 = vadd.f32 %v365, 1.0
    %v367 = vmul.f32 %v366, 0.5
    %v368 = vld [vmem:[#allocation6] sm:$0xf]
    %v369 = vld [vmem:[#allocation6 + $0x4] sm:$0xf]
    %v370 = vld [vmem:[#allocation6 + $0x8] sm:$0xf]
    %v371 = vld [vmem:[#allocation6 + $0xc] sm:$0xf]
    %v372 = vld [vmem:[#allocation6 + $0x10] sm:$0xf]
    %v373 = vld [vmem:[#allocation6 + $0x14] sm:$0xf]
    %v374 = vld [vmem:[#allocation6 + $0x18] sm:$0xf]
    %v375 = vld [vmem:[#allocation6 + $0x1c] sm:$0xf]
    %v376 = vld [vmem:[#allocation6 + $0x20] sm:$0xf]
    %v377 = vld [vmem:[#allocation6 + $0x24] sm:$0xf]
    %v378 = vld [vmem:[#allocation6 + $0x28] sm:$0xf]
    %v379 = vld [vmem:[#allocation6 + $0x2c] sm:$0xf]
    %v380 = vld [vmem:[#allocation6 + $0x30] sm:$0xf]
    %v381 = vld [vmem:[#allocation6 + $0x34] sm:$0xf]
    %v382 = vld [vmem:[#allocation6 + $0x38] sm:$0xf]
    %v383 = vld [vmem:[#allocation6 + $0x3c] sm:$0xf]
    %v384 = vld [vmem:[%s5] sm:$0x1]
    %v386 = vlaneseq
    %v387 = vshrl.u32 %v386, 7
    %v388 = vsub.s32 0, %v387
    %v389 = vrot.slane %v384, %v388
    %v407 = vunpack.c.l.b16 %v368
    %v408 = vunpack.c.l.b16 %v369
    %v409 = vunpack.c.l.b16 %v370
    %v410 = vunpack.c.l.b16 %v371
    %v411 = vunpack.c.l.b16 %v372
    %v412 = vunpack.c.l.b16 %v373
    %v413 = vunpack.c.l.b16 %v374
    %v414 = vunpack.c.l.b16 %v375
    %v415 = vunpack.c.l.b16 %v376
    %v416 = vunpack.c.l.b16 %v377
    %v417 = vunpack.c.l.b16 %v378
    %v418 = vunpack.c.l.b16 %v379
    %v419 = vunpack.c.l.b16 %v380
    %v420 = vunpack.c.l.b16 %v381
    %v421 = vunpack.c.l.b16 %v382
    %v422 = vunpack.c.l.b16 %v383
    %v423 = vpack.c.b16 %v408, %v407
    %v424 = vpack.c.b16 %v410, %v409
    %v425 = vpack.c.b16 %v412, %v411
    %v426 = vpack.c.b16 %v414, %v413
    %v427 = vpack.c.b16 %v416, %v415
    %v428 = vpack.c.b16 %v418, %v417
    %v429 = vpack.c.b16 %v420, %v419
    %v430 = vpack.c.b16 %v422, %v421
    %439 = vmatprep.subr.bf16.mxu0 0
    %440 = vmatpush1.bf16.msra.mxu0 %v423
    %441 = vmatprep.subr.bf16.mxu0 0
    %442 = vmatpush1.bf16.msra.mxu0 %v424
    %443 = vmatprep.subr.bf16.mxu0 0
    %444 = vmatpush1.bf16.msra.mxu0 %v425
    %445 = vmatprep.subr.bf16.mxu0 0
    %446 = vmatpush1.bf16.msra.mxu0 %v426
    %447 = vmatprep.subr.bf16.mxu0 0
    %448 = vmatpush1.bf16.msra.mxu0 %v427
    %449 = vmatprep.subr.bf16.mxu0 0
    %450 = vmatpush1.bf16.msra.mxu0 %v428
    %451 = vmatprep.subr.bf16.mxu0 0
    %452 = vmatpush1.bf16.msra.mxu0 %v429
    %453 = vmatprep.subr.bf16.mxu0 0
    %454 = vmatpush1.bf16.msra.mxu0 %v430
    %455 = vmatprep.subr.bf16.mxu0 0
    %456 = vmatpush1.bf16.msra.mxu0 0
    %457 = vmatprep.subr.bf16.mxu0 0
    %458 = vmatpush1.bf16.msra.mxu0 0
    %459 = vmatprep.subr.bf16.mxu0 0
    %460 = vmatpush1.bf16.msra.mxu0 0
    %461 = vmatprep.subr.bf16.mxu0 0
    %462 = vmatpush1.bf16.msra.mxu0 0
    %463 = vmatprep.subr.bf16.mxu0 0
    %464 = vmatpush1.bf16.msra.mxu0 0
    %465 = vmatprep.subr.bf16.mxu0 0
    %466 = vmatpush1.bf16.msra.mxu0 0
    %467 = vmatprep.subr.bf16.mxu0 0
    %468 = vmatpush1.bf16.msra.mxu0 0
    %469 = vmatprep.subr.bf16.mxu0 0
    %470 = vmatpush1.bf16.msra.mxu0 0
    %471 = vmatprep.mubr.bf16.mxu0 0
    %472 = vmatmul.mubr.bf16.gmra.mrb[0].mxu0 %v202
    %v473 = vpop.f32.mrb[0].mxu0
    %v474 = vadd.f32 %v389, %v473
    %v475 = vpop.f32.mrb[0].mxu0
    %v476 = vpop.f32.mrb[0].mxu0
    %v477 = vpop.f32.mrb[0].mxu0
    %478 = vdwg.mxu0
    %479 = vst [vmem:[#allocation2] sm:$0xff] 0
    %v480 = vpack.c.bf16 %v367, %v367
    %481 = vst [vmem:[#allocation2] sm:$0xf] %v480
    %v482 = vpack.c.bf16 %v474, %v474
    %v484 = vrot.slane %v482, 4
    %486 = vst [vmem:[#allocation2] sm:$0x30] %v484
    %v487 = vld [vmem:[#allocation2] sm:$0xff]
    %v488 = vld [vmem:[%s6] sm:$0x1]
    %v489 = vld [vmem:[%s6 + $0x1] sm:$0x1]
    %v490 = vlaneseq
    %v491 = vshrl.u32 %v490, 7
    %v492 = vadd.s32 %v491, 8
    %v493 = vlaneseq
    %v494 = vshrl.u32 %v493, 7
    %v495 = vsub.s32 0, %v494
    %v496 = vrot.slane %v488, %v495
    %vm497 = vcmp.eq.s32.totalorder %v491, %v496
    %vm498 = vcmp.eq.s32.totalorder %v492, %v496
    %v499 = vsel %vm497, 1.0, 0.0
    %v500 = vsel %vm498, 1.0, 0.0
    %v501 = vpack.c.bf16 %v500, %v499
    %v502 = vlaneseq
    %v503 = vshrl.u32 %v502, 7
    %v504 = vsub.s32 0, %v503
    %v505 = vrot.slane %v489, %v504
    %vm506 = vcmp.eq.s32.totalorder %v491, %v505
    %vm507 = vcmp.eq.s32.totalorder %v492, %v505
    %v508 = vsel %vm506, 1.0, 0.0
    %v509 = vsel %vm507, 1.0, 0.0
    %v510 = vpack.c.bf16 %v509, %v508
    %vm511 = vcmask 130048
    %v512 = vsel %vm511, %v508, 0.0
    %513 = vadd.xlane.f32.xlu0 %v512
    %v514 = vpop.xlane.xlu0 %513
    %v515 = vsel %vm511, %v509, 0.0
    %516 = vadd.xlane.f32.xlu0 %v515
    %v517 = vpop.xlane.xlu0 %516
    %v518 = vmax.f32 %v514, 1.0
    %v519 = vmax.f32 %v517, 1.0
    %v520 = vrcp.pop %v518
    %v521 = vrcp.pop %v519
    %v522 = vld [vmem:[%s7] sm:$0xf]
    %v523 = vld [vmem:[%s7 + $0x4] sm:$0xf]
    %524 = vxpose.xlu0.c.b16.start [1/8] %v501, 128
    %525 = vxpose.xlu0.c.b16.cont [2/8] 0, 128
    %526 = vxpose.xlu0.c.b16.cont [3/8] 0, 128
    %527 = vxpose.xlu0.c.b16.cont [4/8] 0, 128
    %528 = vxpose.xlu0.c.b16.cont [5/8] 0, 128
    %529 = vxpose.xlu0.c.b16.cont [6/8] 0, 128
    %530 = vxpose.xlu0.c.b16.cont [7/8] 0, 128
    %531 = vxpose.xlu0.c.b16.end [8/8] 0, 128
    %v532 = vpop.trf.xlu0
    %v533 = vpop.trf.xlu0
    %v534 = vpop.trf.xlu0
    %v535 = vpop.trf.xlu0
    %v536 = vpop.trf.xlu0
    %v537 = vpop.trf.xlu0
    %v538 = vpop.trf.xlu0
    %v539 = vpop.trf.xlu0
    %v541 = vsel %vm511, %v532, 0
    %543 = vmatprep.subr.bf16.mxu0 0
    %544 = vmatpush1.bf16.msra.mxu0 %v487
    %545 = vmatprep.subr.bf16.mxu0 0
    %546 = vmatpush1.bf16.msra.mxu0 0
    %547 = vmatprep.subr.bf16.mxu0 0
    %548 = vmatpush1.bf16.msra.mxu0 0
    %549 = vmatprep.subr.bf16.mxu0 0
    %550 = vmatpush1.bf16.msra.mxu0 0
    %551 = vmatprep.subr.bf16.mxu0 0
    %552 = vmatpush1.bf16.msra.mxu0 0
    %553 = vmatprep.subr.bf16.mxu0 0
    %554 = vmatpush1.bf16.msra.mxu0 0
    %555 = vmatprep.subr.bf16.mxu0 0
    %556 = vmatpush1.bf16.msra.mxu0 0
    %557 = vmatprep.subr.bf16.mxu0 0
    %558 = vmatpush1.bf16.msra.mxu0 0
    %559 = vmatprep.subr.bf16.mxu0 0
    %560 = vmatpush1.bf16.msra.mxu0 0
    %561 = vmatprep.subr.bf16.mxu0 0
    %562 = vmatpush1.bf16.msra.mxu0 0
    %563 = vmatprep.subr.bf16.mxu0 0
    %564 = vmatpush1.bf16.msra.mxu0 0
    %565 = vmatprep.subr.bf16.mxu0 0
    %566 = vmatpush1.bf16.msra.mxu0 0
    %567 = vmatprep.subr.bf16.mxu0 0
    %568 = vmatpush1.bf16.msra.mxu0 0
    %569 = vmatprep.subr.bf16.mxu0 0
    %570 = vmatpush1.bf16.msra.mxu0 0
    %571 = vmatprep.subr.bf16.mxu0 0
    %572 = vmatpush1.bf16.msra.mxu0 0
    %573 = vmatprep.subr.bf16.mxu0 0
    %574 = vmatpush1.bf16.msra.mxu0 0
    %575 = vmatprep.mubr.bf16.mxu0 0
    %576 = vmatmul.mubr.bf16.gmra.mrb[0].mxu0 %v541
    %v577 = vpop.f32.mrb[0].mxu0
    %v578 = vadd.f32 0.0, %v577
    %v579 = vpop.f32.mrb[0].mxu0
    %v580 = vpop.f32.mrb[0].mxu0
    %v581 = vadd.f32 0.0, %v580
    %v582 = vpop.f32.mrb[0].mxu0
    %583 = vdwg.mxu0
    %v584 = vpack.c.bf16 %v581, %v578
    %v587 = vunpack.c.l.b16 %v522
    %v588 = vunpack.c.l.b16 %v523
    %v589 = vpack.c.b16 %v588, %v587
    %v591 = vld [vmem:[#allocation8] sm:$0xf]
    %v592 = vld [vmem:[#allocation8 + $0x4] sm:$0xf]
    %v593 = vld [vmem:[#allocation8 + $0x8] sm:$0xf]
    %v594 = vld [vmem:[#allocation8 + $0xc] sm:$0xf]
    %v595 = vld [vmem:[#allocation8 + $0x10] sm:$0xf]
    %v596 = vld [vmem:[#allocation8 + $0x14] sm:$0xf]
    %v597 = vld [vmem:[#allocation8 + $0x18] sm:$0xf]
    %v598 = vld [vmem:[#allocation8 + $0x1c] sm:$0xf]
    %v599 = vld [vmem:[#allocation8 + $0x20] sm:$0xf]
    %v600 = vld [vmem:[#allocation8 + $0x24] sm:$0xf]
    %v601 = vld [vmem:[#allocation8 + $0x28] sm:$0xf]
    %v602 = vld [vmem:[#allocation8 + $0x2c] sm:$0xf]
    %v603 = vld [vmem:[#allocation8 + $0x30] sm:$0xf]
    %v604 = vld [vmem:[#allocation8 + $0x34] sm:$0xf]
    %v605 = vld [vmem:[#allocation8 + $0x38] sm:$0xf]
    %v606 = vld [vmem:[#allocation8 + $0x3c] sm:$0xf]
    %v607 = vld [vmem:[#allocation8 + $0x40] sm:$0xf]
    %v608 = vld [vmem:[#allocation8 + $0x44] sm:$0xf]
    %v609 = vld [vmem:[#allocation8 + $0x48] sm:$0xf]
    %v610 = vld [vmem:[#allocation8 + $0x4c] sm:$0xf]
    %v611 = vld [vmem:[#allocation8 + $0x50] sm:$0xf]
    %v612 = vld [vmem:[#allocation8 + $0x54] sm:$0xf]
    %v613 = vld [vmem:[#allocation8 + $0x58] sm:$0xf]
    %v614 = vld [vmem:[#allocation8 + $0x5c] sm:$0xf]
    %v615 = vld [vmem:[#allocation8 + $0x60] sm:$0xf]
    %v616 = vld [vmem:[#allocation8 + $0x64] sm:$0xf]
    %v617 = vld [vmem:[#allocation8 + $0x68] sm:$0xf]
    %v618 = vld [vmem:[#allocation8 + $0x6c] sm:$0xf]
    %v619 = vld [vmem:[#allocation8 + $0x70] sm:$0xf]
    %v620 = vld [vmem:[#allocation8 + $0x74] sm:$0xf]
    %v621 = vld [vmem:[#allocation8 + $0x78] sm:$0xf]
    %v622 = vld [vmem:[#allocation8 + $0x7c] sm:$0xf]
    %v623 = vld [vmem:[%s9] sm:$0x1]
    %v625 = vlaneseq
    %v626 = vshrl.u32 %v625, 7
    %v627 = vsub.s32 0, %v626
    %v628 = vrot.slane %v623, %v627
    %v662 = vunpack.c.l.b16 %v591
    %v663 = vunpack.c.l.b16 %v592
    %v664 = vunpack.c.l.b16 %v593
    %v665 = vunpack.c.l.b16 %v594
    %v666 = vunpack.c.l.b16 %v595
    %v667 = vunpack.c.l.b16 %v596
    %v668 = vunpack.c.l.b16 %v597
    %v669 = vunpack.c.l.b16 %v598
    %v670 = vunpack.c.l.b16 %v599
    %v671 = vunpack.c.l.b16 %v600
    %v672 = vunpack.c.l.b16 %v601
    %v673 = vunpack.c.l.b16 %v602
    %v674 = vunpack.c.l.b16 %v603
    %v675 = vunpack.c.l.b16 %v604
    %v676 = vunpack.c.l.b16 %v605
    %v677 = vunpack.c.l.b16 %v606
    %v678 = vunpack.c.l.b16 %v607
    %v679 = vunpack.c.l.b16 %v608
    %v680 = vunpack.c.l.b16 %v609
    %v681 = vunpack.c.l.b16 %v610
    %v682 = vunpack.c.l.b16 %v611
    %v683 = vunpack.c.l.b16 %v612
    %v684 = vunpack.c.l.b16 %v613
    %v685 = vunpack.c.l.b16 %v614
    %v686 = vunpack.c.l.b16 %v615
    %v687 = vunpack.c.l.b16 %v616
    %v688 = vunpack.c.l.b16 %v617
    %v689 = vunpack.c.l.b16 %v618
    %v690 = vunpack.c.l.b16 %v619
    %v691 = vunpack.c.l.b16 %v620
    %v692 = vunpack.c.l.b16 %v621
    %v693 = vunpack.c.l.b16 %v622
    %v694 = vpack.c.b16 %v663, %v662
    %v695 = vpack.c.b16 %v665, %v664
    %v696 = vpack.c.b16 %v667, %v666
    %v697 = vpack.c.b16 %v669, %v668
    %v698 = vpack.c.b16 %v671, %v670
    %v699 = vpack.c.b16 %v673, %v672
    %v700 = vpack.c.b16 %v675, %v674
    %v701 = vpack.c.b16 %v677, %v676
    %v702 = vpack.c.b16 %v679, %v678
    %v703 = vpack.c.b16 %v681, %v680
    %v704 = vpack.c.b16 %v683, %v682
    %v705 = vpack.c.b16 %v685, %v684
    %v706 = vpack.c.b16 %v687, %v686
    %v707 = vpack.c.b16 %v689, %v688
    %v708 = vpack.c.b16 %v691, %v690
    %v709 = vpack.c.b16 %v693, %v692
    %726 = vmatprep.subr.bf16.mxu0 0
    %727 = vmatpush1.bf16.msra.mxu0 %v694
    %728 = vmatprep.subr.bf16.mxu0 0
    %729 = vmatpush1.bf16.msra.mxu0 %v695
    %730 = vmatprep.subr.bf16.mxu0 0
    %731 = vmatpush1.bf16.msra.mxu0 %v696
    %732 = vmatprep.subr.bf16.mxu0 0
    %733 = vmatpush1.bf16.msra.mxu0 %v697
    %734 = vmatprep.subr.bf16.mxu0 0
    %735 = vmatpush1.bf16.msra.mxu0 %v698
    %736 = vmatprep.subr.bf16.mxu0 0
    %737 = vmatpush1.bf16.msra.mxu0 %v699
    %738 = vmatprep.subr.bf16.mxu0 0
    %739 = vmatpush1.bf16.msra.mxu0 %v700
    %740 = vmatprep.subr.bf16.mxu0 0
    %741 = vmatpush1.bf16.msra.mxu0 %v701
    %742 = vmatprep.subr.bf16.mxu0 0
    %743 = vmatpush1.bf16.msra.mxu0 %v702
    %744 = vmatprep.subr.bf16.mxu0 0
    %745 = vmatpush1.bf16.msra.mxu0 %v703
    %746 = vmatprep.subr.bf16.mxu0 0
    %747 = vmatpush1.bf16.msra.mxu0 %v704
    %748 = vmatprep.subr.bf16.mxu0 0
    %749 = vmatpush1.bf16.msra.mxu0 %v705
    %750 = vmatprep.subr.bf16.mxu0 0
    %751 = vmatpush1.bf16.msra.mxu0 %v706
    %752 = vmatprep.subr.bf16.mxu0 0
    %753 = vmatpush1.bf16.msra.mxu0 %v707
    %754 = vmatprep.subr.bf16.mxu0 0
    %755 = vmatpush1.bf16.msra.mxu0 %v708
    %756 = vmatprep.subr.bf16.mxu0 0
    %757 = vmatpush1.bf16.msra.mxu0 %v709
    %758 = vmatprep.mubr.bf16.mxu0 %v589
    %759 = vmatmul.mubr.bf16.gmra.mrb[0].mxu0 %v584
    %v760 = vpop.f32.mrb[0].mxu0
    %v761 = vadd.f32 %v628, %v760
    %v762 = vpop.f32.mrb[0].mxu0
    %v763 = vpop.f32.mrb[0].mxu0
    %v764 = vadd.f32 %v628, %v763
    %v765 = vpop.f32.mrb[0].mxu0
    %766 = vdwg.mxu0
    %v767 = vmax.f32 %v761, 0.0
    %v768 = vmax.f32 %v764, 0.0
    %v769 = vpack.c.bf16 %v768, %v767
    %v771 = vsel %vm511, %v510, 0
    %773 = vmatprep.subr.bf16.mxu0 0
    %774 = vmatpush1.bf16.msra.mxu0 %v769
    %775 = vmatprep.subr.bf16.mxu0 0
    %776 = vmatpush1.bf16.msra.mxu0 0
    %777 = vmatprep.subr.bf16.mxu0 0
    %778 = vmatpush1.bf16.msra.mxu0 0
    %779 = vmatprep.subr.bf16.mxu0 0
    %780 = vmatpush1.bf16.msra.mxu0 0
    %781 = vmatprep.subr.bf16.mxu0 0
    %782 = vmatpush1.bf16.msra.mxu0 0
    %783 = vmatprep.subr.bf16.mxu0 0
    %784 = vmatpush1.bf16.msra.mxu0 0
    %785 = vmatprep.subr.bf16.mxu0 0
    %786 = vmatpush1.bf16.msra.mxu0 0
    %787 = vmatprep.subr.bf16.mxu0 0
    %788 = vmatpush1.bf16.msra.mxu0 0
    %789 = vmatprep.subr.bf16.mxu0 0
    %790 = vmatpush1.bf16.msra.mxu0 0
    %791 = vmatprep.subr.bf16.mxu0 0
    %792 = vmatpush1.bf16.msra.mxu0 0
    %793 = vmatprep.subr.bf16.mxu0 0
    %794 = vmatpush1.bf16.msra.mxu0 0
    %795 = vmatprep.subr.bf16.mxu0 0
    %796 = vmatpush1.bf16.msra.mxu0 0
    %797 = vmatprep.subr.bf16.mxu0 0
    %798 = vmatpush1.bf16.msra.mxu0 0
    %799 = vmatprep.subr.bf16.mxu0 0
    %800 = vmatpush1.bf16.msra.mxu0 0
    %801 = vmatprep.subr.bf16.mxu0 0
    %802 = vmatpush1.bf16.msra.mxu0 0
    %803 = vmatprep.subr.bf16.mxu0 0
    %804 = vmatpush1.bf16.msra.mxu0 0
    %805 = vmatprep.mubr.bf16.mxu0 0
    %806 = vmatmul.mubr.bf16.gmra.mrb[0].mxu0 %v771
    %v807 = vpop.f32.mrb[0].mxu0
    %v808 = vadd.f32 0.0, %v807
    %v809 = vpop.f32.mrb[0].mxu0
    %v810 = vpop.f32.mrb[0].mxu0
    %v811 = vadd.f32 0.0, %v810
    %v812 = vpop.f32.mrb[0].mxu0
    %813 = vdwg.mxu0
    %v814 = vmul.f32 %v808, %v520
    %v815 = vmul.f32 %v811, %v521
    %v816 = vpack.c.bf16 %v815, %v814
    %v817 = vld [vmem:[#allocation9] sm:$0xf]
    %v818 = vld [vmem:[#allocation9 + $0x4] sm:$0xf]
    %v819 = vld [vmem:[#allocation9 + $0x8] sm:$0xf]
    %v820 = vld [vmem:[#allocation9 + $0xc] sm:$0xf]
    %v821 = vld [vmem:[#allocation9 + $0x10] sm:$0xf]
    %v822 = vld [vmem:[#allocation9 + $0x14] sm:$0xf]
    %v823 = vld [vmem:[#allocation9 + $0x18] sm:$0xf]
    %v824 = vld [vmem:[#allocation9 + $0x1c] sm:$0xf]
    %v825 = vld [vmem:[#allocation9 + $0x20] sm:$0xf]
    %v826 = vld [vmem:[#allocation9 + $0x24] sm:$0xf]
    %v827 = vld [vmem:[#allocation9 + $0x28] sm:$0xf]
    %v828 = vld [vmem:[#allocation9 + $0x2c] sm:$0xf]
    %v829 = vld [vmem:[#allocation9 + $0x30] sm:$0xf]
    %v830 = vld [vmem:[#allocation9 + $0x34] sm:$0xf]
    %v831 = vld [vmem:[#allocation9 + $0x38] sm:$0xf]
    %v832 = vld [vmem:[#allocation9 + $0x3c] sm:$0xf]
    %v833 = vld [vmem:[#allocation9 + $0x40] sm:$0xf]
    %v834 = vld [vmem:[#allocation9 + $0x44] sm:$0xf]
    %v835 = vld [vmem:[#allocation9 + $0x48] sm:$0xf]
    %v836 = vld [vmem:[#allocation9 + $0x4c] sm:$0xf]
    %v837 = vld [vmem:[#allocation9 + $0x50] sm:$0xf]
    %v838 = vld [vmem:[#allocation9 + $0x54] sm:$0xf]
    %v839 = vld [vmem:[#allocation9 + $0x58] sm:$0xf]
    %v840 = vld [vmem:[#allocation9 + $0x5c] sm:$0xf]
    %v841 = vld [vmem:[#allocation9 + $0x60] sm:$0xf]
    %v842 = vld [vmem:[#allocation9 + $0x64] sm:$0xf]
    %v843 = vld [vmem:[#allocation9 + $0x68] sm:$0xf]
    %v844 = vld [vmem:[#allocation9 + $0x6c] sm:$0xf]
    %v845 = vld [vmem:[#allocation9 + $0x70] sm:$0xf]
    %v846 = vld [vmem:[#allocation9 + $0x74] sm:$0xf]
    %v847 = vld [vmem:[#allocation9 + $0x78] sm:$0xf]
    %v848 = vld [vmem:[#allocation9 + $0x7c] sm:$0xf]
    %v849 = vld [vmem:[%s11] sm:$0x1]
    %v851 = vlaneseq
    %v852 = vshrl.u32 %v851, 7
    %v853 = vsub.s32 0, %v852
    %v854 = vrot.slane %v849, %v853
    %v888 = vunpack.c.l.b16 %v817
    %v889 = vunpack.c.l.b16 %v818
    %v890 = vunpack.c.l.b16 %v819
    %v891 = vunpack.c.l.b16 %v820
    %v892 = vunpack.c.l.b16 %v821
    %v893 = vunpack.c.l.b16 %v822
    %v894 = vunpack.c.l.b16 %v823
    %v895 = vunpack.c.l.b16 %v824
    %v896 = vunpack.c.l.b16 %v825
    %v897 = vunpack.c.l.b16 %v826
    %v898 = vunpack.c.l.b16 %v827
    %v899 = vunpack.c.l.b16 %v828
    %v900 = vunpack.c.l.b16 %v829
    %v901 = vunpack.c.l.b16 %v830
    %v902 = vunpack.c.l.b16 %v831
    %v903 = vunpack.c.l.b16 %v832
    %v904 = vunpack.c.l.b16 %v833
    %v905 = vunpack.c.l.b16 %v834
    %v906 = vunpack.c.l.b16 %v835
    %v907 = vunpack.c.l.b16 %v836
    %v908 = vunpack.c.l.b16 %v837
    %v909 = vunpack.c.l.b16 %v838
    %v910 = vunpack.c.l.b16 %v839
    %v911 = vunpack.c.l.b16 %v840
    %v912 = vunpack.c.l.b16 %v841
    %v913 = vunpack.c.l.b16 %v842
    %v914 = vunpack.c.l.b16 %v843
    %v915 = vunpack.c.l.b16 %v844
    %v916 = vunpack.c.l.b16 %v845
    %v917 = vunpack.c.l.b16 %v846
    %v918 = vunpack.c.l.b16 %v847
    %v919 = vunpack.c.l.b16 %v848
    %v920 = vpack.c.b16 %v889, %v888
    %v921 = vpack.c.b16 %v891, %v890
    %v922 = vpack.c.b16 %v893, %v892
    %v923 = vpack.c.b16 %v895, %v894
    %v924 = vpack.c.b16 %v897, %v896
    %v925 = vpack.c.b16 %v899, %v898
    %v926 = vpack.c.b16 %v901, %v900
    %v927 = vpack.c.b16 %v903, %v902
    %v928 = vpack.c.b16 %v905, %v904
    %v929 = vpack.c.b16 %v907, %v906
    %v930 = vpack.c.b16 %v909, %v908
    %v931 = vpack.c.b16 %v911, %v910
    %v932 = vpack.c.b16 %v913, %v912
    %v933 = vpack.c.b16 %v915, %v914
    %v934 = vpack.c.b16 %v917, %v916
    %v935 = vpack.c.b16 %v919, %v918
    %952 = vmatprep.subr.bf16.mxu0 0
    %953 = vmatpush1.bf16.msra.mxu0 %v920
    %954 = vmatprep.subr.bf16.mxu0 0
    %955 = vmatpush1.bf16.msra.mxu0 %v921
    %956 = vmatprep.subr.bf16.mxu0 0
    %957 = vmatpush1.bf16.msra.mxu0 %v922
    %958 = vmatprep.subr.bf16.mxu0 0
    %959 = vmatpush1.bf16.msra.mxu0 %v923
    %960 = vmatprep.subr.bf16.mxu0 0
    %961 = vmatpush1.bf16.msra.mxu0 %v924
    %962 = vmatprep.subr.bf16.mxu0 0
    %963 = vmatpush1.bf16.msra.mxu0 %v925
    %964 = vmatprep.subr.bf16.mxu0 0
    %965 = vmatpush1.bf16.msra.mxu0 %v926
    %966 = vmatprep.subr.bf16.mxu0 0
    %967 = vmatpush1.bf16.msra.mxu0 %v927
    %968 = vmatprep.subr.bf16.mxu0 0
    %969 = vmatpush1.bf16.msra.mxu0 %v928
    %970 = vmatprep.subr.bf16.mxu0 0
    %971 = vmatpush1.bf16.msra.mxu0 %v929
    %972 = vmatprep.subr.bf16.mxu0 0
    %973 = vmatpush1.bf16.msra.mxu0 %v930
    %974 = vmatprep.subr.bf16.mxu0 0
    %975 = vmatpush1.bf16.msra.mxu0 %v931
    %976 = vmatprep.subr.bf16.mxu0 0
    %977 = vmatpush1.bf16.msra.mxu0 %v932
    %978 = vmatprep.subr.bf16.mxu0 0
    %979 = vmatpush1.bf16.msra.mxu0 %v933
    %980 = vmatprep.subr.bf16.mxu0 0
    %981 = vmatpush1.bf16.msra.mxu0 %v934
    %982 = vmatprep.subr.bf16.mxu0 0
    %983 = vmatpush1.bf16.msra.mxu0 %v935
    %984 = vmatprep.mubr.bf16.mxu0 %v487
    %985 = vmatmul.mubr.bf16.gmra.mrb[0].mxu0 %v816
    %v986 = vpop.f32.mrb[0].mxu0
    %v987 = vadd.f32 %v854, %v986
    %v988 = vpop.f32.mrb[0].mxu0
    %v989 = vpop.f32.mrb[0].mxu0
    %v990 = vadd.f32 %v854, %v989
    %v991 = vpop.f32.mrb[0].mxu0
    %992 = vdwg.mxu0
    %v993 = vmax.f32 %v987, 0.0
    %v994 = vmax.f32 %v990, 0.0
    %v995 = vmul.f32 %v993, %v993
    %v996 = vmul.f32 %v994, %v994
    %997 = vadd.xlane.f32.xlu0 %v995
    %v998 = vpop.xlane.xlu0 %997
    %999 = vadd.xlane.f32.xlu0 %v996
    %v1000 = vpop.xlane.xlu0 %999
    %v1001 = vmax.f32 %v998, 1e-24
    %v1002 = vmax.f32 %v1000, 1e-24
    %v1003 = vrsqrt.pop %v1001
    %v1004 = vrsqrt.pop %v1002
    %v1005 = vmul.f32 %v993, %v1003
    %v1006 = vmul.f32 %v994, %v1004
    %v1007 = vpack.c.bf16 %v1006, %v1005
    %1008 = vmatprep.subr.bf16.mxu0 0
    %1009 = vmatpush1.bf16.msra.mxu0 %v1007
    %1010 = vmatprep.subr.bf16.mxu0 0
    %1011 = vmatpush1.bf16.msra.mxu0 0
    %1012 = vmatprep.subr.bf16.mxu0 0
    %1013 = vmatpush1.bf16.msra.mxu0 0
    %1014 = vmatprep.subr.bf16.mxu0 0
    %1015 = vmatpush1.bf16.msra.mxu0 0
    %1016 = vmatprep.subr.bf16.mxu0 0
    %1017 = vmatpush1.bf16.msra.mxu0 0
    %1018 = vmatprep.subr.bf16.mxu0 0
    %1019 = vmatpush1.bf16.msra.mxu0 0
    %1020 = vmatprep.subr.bf16.mxu0 0
    %1021 = vmatpush1.bf16.msra.mxu0 0
    %1022 = vmatprep.subr.bf16.mxu0 0
    %1023 = vmatpush1.bf16.msra.mxu0 0
    %1024 = vmatprep.subr.bf16.mxu0 0
    %1025 = vmatpush1.bf16.msra.mxu0 0
    %1026 = vmatprep.subr.bf16.mxu0 0
    %1027 = vmatpush1.bf16.msra.mxu0 0
    %1028 = vmatprep.subr.bf16.mxu0 0
    %1029 = vmatpush1.bf16.msra.mxu0 0
    %1030 = vmatprep.subr.bf16.mxu0 0
    %1031 = vmatpush1.bf16.msra.mxu0 0
    %1032 = vmatprep.subr.bf16.mxu0 0
    %1033 = vmatpush1.bf16.msra.mxu0 0
    %1034 = vmatprep.subr.bf16.mxu0 0
    %1035 = vmatpush1.bf16.msra.mxu0 0
    %1036 = vmatprep.subr.bf16.mxu0 0
    %1037 = vmatpush1.bf16.msra.mxu0 0
    %1038 = vmatprep.subr.bf16.mxu0 0
    %1039 = vmatpush1.bf16.msra.mxu0 0
    %1040 = vmatprep.mubr.bf16.mxu0 0
    %1041 = vmatmul.mubr.bf16.gmra.mrb[0].mxu0 %v541
    %v1042 = vpop.f32.mrb[0].mxu0
    %v1043 = vadd.f32 0.0, %v1042
    %v1044 = vpop.f32.mrb[0].mxu0
    %v1045 = vpop.f32.mrb[0].mxu0
    %v1046 = vadd.f32 0.0, %v1045
    %v1047 = vpop.f32.mrb[0].mxu0
    %1048 = vdwg.mxu0
    %v1049 = vpack.c.bf16 %v1046, %v1043
    %1050 = vxpose.xlu0.c.b16.start [1/8] %v510, 128
    %1051 = vxpose.xlu0.c.b16.cont [2/8] 0, 128
    %1052 = vxpose.xlu0.c.b16.cont [3/8] 0, 128
    %1053 = vxpose.xlu0.c.b16.cont [4/8] 0, 128
    %1054 = vxpose.xlu0.c.b16.cont [5/8] 0, 128
    %1055 = vxpose.xlu0.c.b16.cont [6/8] 0, 128
    %1056 = vxpose.xlu0.c.b16.cont [7/8] 0, 128
    %1057 = vxpose.xlu0.c.b16.end [8/8] 0, 128
    %v1058 = vpop.trf.xlu0
    %v1059 = vpop.trf.xlu0
    %v1060 = vpop.trf.xlu0
    %v1061 = vpop.trf.xlu0
    %v1062 = vpop.trf.xlu0
    %v1063 = vpop.trf.xlu0
    %v1064 = vpop.trf.xlu0
    %v1065 = vpop.trf.xlu0
    %v1067 = vsel %vm511, %v1058, 0
    %1069 = vmatprep.subr.bf16.mxu0 0
    %1070 = vmatpush1.bf16.msra.mxu0 %v1007
    %1071 = vmatprep.subr.bf16.mxu0 0
    %1072 = vmatpush1.bf16.msra.mxu0 0
    %1073 = vmatprep.subr.bf16.mxu0 0
    %1074 = vmatpush1.bf16.msra.mxu0 0
    %1075 = vmatprep.subr.bf16.mxu0 0
    %1076 = vmatpush1.bf16.msra.mxu0 0
    %1077 = vmatprep.subr.bf16.mxu0 0
    %1078 = vmatpush1.bf16.msra.mxu0 0
    %1079 = vmatprep.subr.bf16.mxu0 0
    %1080 = vmatpush1.bf16.msra.mxu0 0
    %1081 = vmatprep.subr.bf16.mxu0 0
    %1082 = vmatpush1.bf16.msra.mxu0 0
    %1083 = vmatprep.subr.bf16.mxu0 0
    %1084 = vmatpush1.bf16.msra.mxu0 0
    %1085 = vmatprep.subr.bf16.mxu0 0
    %1086 = vmatpush1.bf16.msra.mxu0 0
    %1087 = vmatprep.subr.bf16.mxu0 0
    %1088 = vmatpush1.bf16.msra.mxu0 0
    %1089 = vmatprep.subr.bf16.mxu0 0
    %1090 = vmatpush1.bf16.msra.mxu0 0
    %1091 = vmatprep.subr.bf16.mxu0 0
    %1092 = vmatpush1.bf16.msra.mxu0 0
    %1093 = vmatprep.subr.bf16.mxu0 0
    %1094 = vmatpush1.bf16.msra.mxu0 0
    %1095 = vmatprep.subr.bf16.mxu0 0
    %1096 = vmatpush1.bf16.msra.mxu0 0
    %1097 = vmatprep.subr.bf16.mxu0 0
    %1098 = vmatpush1.bf16.msra.mxu0 0
    %1099 = vmatprep.subr.bf16.mxu0 0
    %1100 = vmatpush1.bf16.msra.mxu0 0
    %1101 = vmatprep.mubr.bf16.mxu0 0
    %1102 = vmatmul.mubr.bf16.gmra.mrb[0].mxu0 %v1067
    %v1103 = vpop.f32.mrb[0].mxu0
    %v1104 = vadd.f32 0.0, %v1103
    %v1105 = vpop.f32.mrb[0].mxu0
    %v1106 = vpop.f32.mrb[0].mxu0
    %v1107 = vadd.f32 0.0, %v1106
    %v1108 = vpop.f32.mrb[0].mxu0
    %1109 = vdwg.mxu0
    %v1110 = vpack.c.bf16 %v1107, %v1104
    %v1111 = vld [vmem:[#allocation11] sm:$0xf]
    %v1112 = vld [vmem:[#allocation11 + $0x4] sm:$0xf]
    %v1113 = vld [vmem:[#allocation11 + $0x8] sm:$0xf]
    %v1114 = vld [vmem:[#allocation11 + $0xc] sm:$0xf]
    %v1115 = vld [vmem:[#allocation11 + $0x10] sm:$0xf]
    %v1116 = vld [vmem:[#allocation11 + $0x14] sm:$0xf]
    %v1117 = vld [vmem:[#allocation11 + $0x18] sm:$0xf]
    %v1118 = vld [vmem:[#allocation11 + $0x1c] sm:$0xf]
    %v1119 = vld [vmem:[#allocation11 + $0x20] sm:$0xf]
    %v1120 = vld [vmem:[#allocation11 + $0x24] sm:$0xf]
    %v1121 = vld [vmem:[#allocation11 + $0x28] sm:$0xf]
    %v1122 = vld [vmem:[#allocation11 + $0x2c] sm:$0xf]
    %v1123 = vld [vmem:[#allocation11 + $0x30] sm:$0xf]
    %v1124 = vld [vmem:[#allocation11 + $0x34] sm:$0xf]
    %v1125 = vld [vmem:[#allocation11 + $0x38] sm:$0xf]
    %v1126 = vld [vmem:[#allocation11 + $0x3c] sm:$0xf]
    %v1127 = vld [vmem:[#allocation11 + $0x40] sm:$0xf]
    %v1128 = vld [vmem:[#allocation11 + $0x44] sm:$0xf]
    %v1129 = vld [vmem:[#allocation11 + $0x48] sm:$0xf]
    %v1130 = vld [vmem:[#allocation11 + $0x4c] sm:$0xf]
    %v1131 = vld [vmem:[#allocation11 + $0x50] sm:$0xf]
    %v1132 = vld [vmem:[#allocation11 + $0x54] sm:$0xf]
    %v1133 = vld [vmem:[#allocation11 + $0x58] sm:$0xf]
    %v1134 = vld [vmem:[#allocation11 + $0x5c] sm:$0xf]
    %v1135 = vld [vmem:[#allocation11 + $0x60] sm:$0xf]
    %v1136 = vld [vmem:[#allocation11 + $0x64] sm:$0xf]
    %v1137 = vld [vmem:[#allocation11 + $0x68] sm:$0xf]
    %v1138 = vld [vmem:[#allocation11 + $0x6c] sm:$0xf]
    %v1139 = vld [vmem:[#allocation11 + $0x70] sm:$0xf]
    %v1140 = vld [vmem:[#allocation11 + $0x74] sm:$0xf]
    %v1141 = vld [vmem:[#allocation11 + $0x78] sm:$0xf]
    %v1142 = vld [vmem:[#allocation11 + $0x7c] sm:$0xf]
    %v1143 = vld [vmem:[#allocation11 + $0x80] sm:$0xf]
    %v1144 = vld [vmem:[#allocation11 + $0x84] sm:$0xf]
    %v1145 = vld [vmem:[#allocation11 + $0x88] sm:$0xf]
    %v1146 = vld [vmem:[#allocation11 + $0x8c] sm:$0xf]
    %v1147 = vld [vmem:[#allocation11 + $0x90] sm:$0xf]
    %v1148 = vld [vmem:[#allocation11 + $0x94] sm:$0xf]
    %v1149 = vld [vmem:[#allocation11 + $0x98] sm:$0xf]
    %v1150 = vld [vmem:[#allocation11 + $0x9c] sm:$0xf]
    %v1151 = vld [vmem:[#allocation11 + $0xa0] sm:$0xf]
    %v1152 = vld [vmem:[#allocation11 + $0xa4] sm:$0xf]
    %v1153 = vld [vmem:[#allocation11 + $0xa8] sm:$0xf]
    %v1154 = vld [vmem:[#allocation11 + $0xac] sm:$0xf]
    %v1155 = vld [vmem:[#allocation11 + $0xb0] sm:$0xf]
    %v1156 = vld [vmem:[#allocation11 + $0xb4] sm:$0xf]
    %v1157 = vld [vmem:[#allocation11 + $0xb8] sm:$0xf]
    %v1158 = vld [vmem:[#allocation11 + $0xbc] sm:$0xf]
    %v1159 = vld [vmem:[%s13] sm:$0x1]
    %v1161 = vlaneseq
    %v1162 = vshrl.u32 %v1161, 7
    %v1163 = vsub.s32 0, %v1162
    %v1164 = vrot.slane %v1159, %v1163
    %v1214 = vunpack.c.l.b16 %v1111
    %v1215 = vunpack.c.l.b16 %v1112
    %v1216 = vunpack.c.l.b16 %v1113
    %v1217 = vunpack.c.l.b16 %v1114
    %v1218 = vunpack.c.l.b16 %v1115
    %v1219 = vunpack.c.l.b16 %v1116
    %v1220 = vunpack.c.l.b16 %v1117
    %v1221 = vunpack.c.l.b16 %v1118
    %v1222 = vunpack.c.l.b16 %v1119
    %v1223 = vunpack.c.l.b16 %v1120
    %v1224 = vunpack.c.l.b16 %v1121
    %v1225 = vunpack.c.l.b16 %v1122
    %v1226 = vunpack.c.l.b16 %v1123
    %v1227 = vunpack.c.l.b16 %v1124
    %v1228 = vunpack.c.l.b16 %v1125
    %v1229 = vunpack.c.l.b16 %v1126
    %v1230 = vunpack.c.l.b16 %v1127
    %v1231 = vunpack.c.l.b16 %v1128
    %v1232 = vunpack.c.l.b16 %v1129
    %v1233 = vunpack.c.l.b16 %v1130
    %v1234 = vunpack.c.l.b16 %v1131
    %v1235 = vunpack.c.l.b16 %v1132
    %v1236 = vunpack.c.l.b16 %v1133
    %v1237 = vunpack.c.l.b16 %v1134
    %v1238 = vunpack.c.l.b16 %v1135
    %v1239 = vunpack.c.l.b16 %v1136
    %v1240 = vunpack.c.l.b16 %v1137
    %v1241 = vunpack.c.l.b16 %v1138
    %v1242 = vunpack.c.l.b16 %v1139
    %v1243 = vunpack.c.l.b16 %v1140
    %v1244 = vunpack.c.l.b16 %v1141
    %v1245 = vunpack.c.l.b16 %v1142
    %v1246 = vunpack.c.l.b16 %v1143
    %v1247 = vunpack.c.l.b16 %v1144
    %v1248 = vunpack.c.l.b16 %v1145
    %v1249 = vunpack.c.l.b16 %v1146
    %v1250 = vunpack.c.l.b16 %v1147
    %v1251 = vunpack.c.l.b16 %v1148
    %v1252 = vunpack.c.l.b16 %v1149
    %v1253 = vunpack.c.l.b16 %v1150
    %v1254 = vunpack.c.l.b16 %v1151
    %v1255 = vunpack.c.l.b16 %v1152
    %v1256 = vunpack.c.l.b16 %v1153
    %v1257 = vunpack.c.l.b16 %v1154
    %v1258 = vunpack.c.l.b16 %v1155
    %v1259 = vunpack.c.l.b16 %v1156
    %v1260 = vunpack.c.l.b16 %v1157
    %v1261 = vunpack.c.l.b16 %v1158
    %v1262 = vpack.c.b16 %v1215, %v1214
    %v1263 = vpack.c.b16 %v1217, %v1216
    %v1264 = vpack.c.b16 %v1219, %v1218
    %v1265 = vpack.c.b16 %v1221, %v1220
    %v1266 = vpack.c.b16 %v1223, %v1222
    %v1267 = vpack.c.b16 %v1225, %v1224
    %v1268 = vpack.c.b16 %v1227, %v1226
    %v1269 = vpack.c.b16 %v1229, %v1228
    %v1270 = vpack.c.b16 %v1231, %v1230
    %v1271 = vpack.c.b16 %v1233, %v1232
    %v1272 = vpack.c.b16 %v1235, %v1234
    %v1273 = vpack.c.b16 %v1237, %v1236
    %v1274 = vpack.c.b16 %v1239, %v1238
    %v1275 = vpack.c.b16 %v1241, %v1240
    %v1276 = vpack.c.b16 %v1243, %v1242
    %v1277 = vpack.c.b16 %v1245, %v1244
    %v1278 = vpack.c.b16 %v1247, %v1246
    %v1279 = vpack.c.b16 %v1249, %v1248
    %v1280 = vpack.c.b16 %v1251, %v1250
    %v1281 = vpack.c.b16 %v1253, %v1252
    %v1282 = vpack.c.b16 %v1255, %v1254
    %v1283 = vpack.c.b16 %v1257, %v1256
    %v1284 = vpack.c.b16 %v1259, %v1258
    %v1285 = vpack.c.b16 %v1261, %v1260
    %1310 = vmatprep.subr.bf16.mxu0 0
    %1311 = vmatpush1.bf16.msra.mxu0 %v1262
    %1312 = vmatprep.subr.bf16.mxu0 0
    %1313 = vmatpush1.bf16.msra.mxu0 %v1263
    %1314 = vmatprep.subr.bf16.mxu0 0
    %1315 = vmatpush1.bf16.msra.mxu0 %v1264
    %1316 = vmatprep.subr.bf16.mxu0 0
    %1317 = vmatpush1.bf16.msra.mxu0 %v1265
    %1318 = vmatprep.subr.bf16.mxu0 0
    %1319 = vmatpush1.bf16.msra.mxu0 %v1266
    %1320 = vmatprep.subr.bf16.mxu0 0
    %1321 = vmatpush1.bf16.msra.mxu0 %v1267
    %1322 = vmatprep.subr.bf16.mxu0 0
    %1323 = vmatpush1.bf16.msra.mxu0 %v1268
    %1324 = vmatprep.subr.bf16.mxu0 0
    %1325 = vmatpush1.bf16.msra.mxu0 %v1269
    %1326 = vmatprep.subr.bf16.mxu0 0
    %1327 = vmatpush1.bf16.msra.mxu0 %v1270
    %1328 = vmatprep.subr.bf16.mxu0 0
    %1329 = vmatpush1.bf16.msra.mxu0 %v1271
    %1330 = vmatprep.subr.bf16.mxu0 0
    %1331 = vmatpush1.bf16.msra.mxu0 %v1272
    %1332 = vmatprep.subr.bf16.mxu0 0
    %1333 = vmatpush1.bf16.msra.mxu0 %v1273
    %1334 = vmatprep.subr.bf16.mxu0 0
    %1335 = vmatpush1.bf16.msra.mxu0 %v1274
    %1336 = vmatprep.subr.bf16.mxu0 0
    %1337 = vmatpush1.bf16.msra.mxu0 %v1275
    %1338 = vmatprep.subr.bf16.mxu0 0
    %1339 = vmatpush1.bf16.msra.mxu0 %v1276
    %1340 = vmatprep.subr.bf16.mxu0 0
    %1341 = vmatpush1.bf16.msra.mxu0 %v1277
    %1342 = vmatprep.mubr.bf16.mxu0 %v1110
    %1343 = vmatmul.mubr.bf16.gmra.mrb[0].mxu0 %v1049
    %v1344 = vpop.f32.mrb[0].mxu0
    %v1345 = vadd.f32 %v1164, %v1344
    %v1346 = vpop.f32.mrb[0].mxu0
    %v1347 = vpop.f32.mrb[0].mxu0
    %v1348 = vadd.f32 %v1164, %v1347
    %v1349 = vpop.f32.mrb[0].mxu0
    %1350 = vdwg.mxu0
    %1351 = vmatprep.subr.bf16.mxu0 0
    %1352 = vmatpush1.bf16.msra.mxu0 %v1278
    %1353 = vmatprep.subr.bf16.mxu0 0
    %1354 = vmatpush1.bf16.msra.mxu0 %v1279
    %1355 = vmatprep.subr.bf16.mxu0 0
    %1356 = vmatpush1.bf16.msra.mxu0 %v1280
    %1357 = vmatprep.subr.bf16.mxu0 0
    %1358 = vmatpush1.bf16.msra.mxu0 %v1281
    %1359 = vmatprep.subr.bf16.mxu0 0
    %1360 = vmatpush1.bf16.msra.mxu0 %v1282
    %1361 = vmatprep.subr.bf16.mxu0 0
    %1362 = vmatpush1.bf16.msra.mxu0 %v1283
    %1363 = vmatprep.subr.bf16.mxu0 0
    %1364 = vmatpush1.bf16.msra.mxu0 %v1284
    %1365 = vmatprep.subr.bf16.mxu0 0
    %1366 = vmatpush1.bf16.msra.mxu0 %v1285
    %1367 = vmatprep.subr.bf16.mxu0 0
    %1368 = vmatpush1.bf16.msra.mxu0 0
    %1369 = vmatprep.subr.bf16.mxu0 0
    %1370 = vmatpush1.bf16.msra.mxu0 0
    %1371 = vmatprep.subr.bf16.mxu0 0
    %1372 = vmatpush1.bf16.msra.mxu0 0
    %1373 = vmatprep.subr.bf16.mxu0 0
    %1374 = vmatpush1.bf16.msra.mxu0 0
    %1375 = vmatprep.subr.bf16.mxu0 0
    %1376 = vmatpush1.bf16.msra.mxu0 0
    %1377 = vmatprep.subr.bf16.mxu0 0
    %1378 = vmatpush1.bf16.msra.mxu0 0
    %1379 = vmatprep.subr.bf16.mxu0 0
    %1380 = vmatpush1.bf16.msra.mxu0 0
    %1381 = vmatprep.subr.bf16.mxu0 0
    %1382 = vmatpush1.bf16.msra.mxu0 0
    %1383 = vmatprep.mubr.bf16.mxu0 0
    %1384 = vmatmul.mubr.bf16.gmra.mrb[0].mxu0 %v589
    %v1385 = vpop.f32.mrb[0].mxu0
    %v1386 = vadd.f32 %v1345, %v1385
    %v1387 = vpop.f32.mrb[0].mxu0
    %v1388 = vpop.f32.mrb[0].mxu0
    %v1389 = vadd.f32 %v1348, %v1388
    %v1390 = vpop.f32.mrb[0].mxu0
    %1391 = vdwg.mxu0
    %v1392 = vmax.f32 %v1386, 0.0
    %v1393 = vmax.f32 %v1389, 0.0
    %v1394 = vpack.c.bf16 %v1393, %v1392
    %v1395 = vld [vmem:[#allocation12] sm:$0xf]
    %v1396 = vld [vmem:[#allocation12 + $0x4] sm:$0xf]
    %v1397 = vld [vmem:[#allocation12 + $0x8] sm:$0xf]
    %v1398 = vld [vmem:[#allocation12 + $0xc] sm:$0xf]
    %v1399 = vld [vmem:[#allocation12 + $0x10] sm:$0xf]
    %v1400 = vld [vmem:[#allocation12 + $0x14] sm:$0xf]
    %v1401 = vld [vmem:[#allocation12 + $0x18] sm:$0xf]
    %v1402 = vld [vmem:[#allocation12 + $0x1c] sm:$0xf]
    %v1403 = vld [vmem:[#allocation12 + $0x20] sm:$0xf]
    %v1404 = vld [vmem:[#allocation12 + $0x24] sm:$0xf]
    %v1405 = vld [vmem:[#allocation12 + $0x28] sm:$0xf]
    %v1406 = vld [vmem:[#allocation12 + $0x2c] sm:$0xf]
    %v1407 = vld [vmem:[#allocation12 + $0x30] sm:$0xf]
    %v1408 = vld [vmem:[#allocation12 + $0x34] sm:$0xf]
    %v1409 = vld [vmem:[#allocation12 + $0x38] sm:$0xf]
    %v1410 = vld [vmem:[#allocation12 + $0x3c] sm:$0xf]
    %v1411 = vld [vmem:[#allocation12 + $0x40] sm:$0xf]
    %v1412 = vld [vmem:[#allocation12 + $0x44] sm:$0xf]
    %v1413 = vld [vmem:[#allocation12 + $0x48] sm:$0xf]
    %v1414 = vld [vmem:[#allocation12 + $0x4c] sm:$0xf]
    %v1415 = vld [vmem:[#allocation12 + $0x50] sm:$0xf]
    %v1416 = vld [vmem:[#allocation12 + $0x54] sm:$0xf]
    %v1417 = vld [vmem:[#allocation12 + $0x58] sm:$0xf]
    %v1418 = vld [vmem:[#allocation12 + $0x5c] sm:$0xf]
    %v1419 = vld [vmem:[#allocation12 + $0x60] sm:$0xf]
    %v1420 = vld [vmem:[#allocation12 + $0x64] sm:$0xf]
    %v1421 = vld [vmem:[#allocation12 + $0x68] sm:$0xf]
    %v1422 = vld [vmem:[#allocation12 + $0x6c] sm:$0xf]
    %v1423 = vld [vmem:[#allocation12 + $0x70] sm:$0xf]
    %v1424 = vld [vmem:[#allocation12 + $0x74] sm:$0xf]
    %v1425 = vld [vmem:[#allocation12 + $0x78] sm:$0xf]
    %v1426 = vld [vmem:[#allocation12 + $0x7c] sm:$0xf]
    %v1427 = vld [vmem:[%s15] sm:$0x1]
    %v1429 = vlaneseq
    %v1430 = vshrl.u32 %v1429, 7
    %v1431 = vsub.s32 0, %v1430
    %v1432 = vrot.slane %v1427, %v1431
    %v1466 = vunpack.c.l.b16 %v1395
    %v1467 = vunpack.c.l.b16 %v1396
    %v1468 = vunpack.c.l.b16 %v1397
    %v1469 = vunpack.c.l.b16 %v1398
    %v1470 = vunpack.c.l.b16 %v1399
    %v1471 = vunpack.c.l.b16 %v1400
    %v1472 = vunpack.c.l.b16 %v1401
    %v1473 = vunpack.c.l.b16 %v1402
    %v1474 = vunpack.c.l.b16 %v1403
    %v1475 = vunpack.c.l.b16 %v1404
    %v1476 = vunpack.c.l.b16 %v1405
    %v1477 = vunpack.c.l.b16 %v1406
    %v1478 = vunpack.c.l.b16 %v1407
    %v1479 = vunpack.c.l.b16 %v1408
    %v1480 = vunpack.c.l.b16 %v1409
    %v1481 = vunpack.c.l.b16 %v1410
    %v1482 = vunpack.c.l.b16 %v1411
    %v1483 = vunpack.c.l.b16 %v1412
    %v1484 = vunpack.c.l.b16 %v1413
    %v1485 = vunpack.c.l.b16 %v1414
    %v1486 = vunpack.c.l.b16 %v1415
    %v1487 = vunpack.c.l.b16 %v1416
    %v1488 = vunpack.c.l.b16 %v1417
    %v1489 = vunpack.c.l.b16 %v1418
    %v1490 = vunpack.c.l.b16 %v1419
    %v1491 = vunpack.c.l.b16 %v1420
    %v1492 = vunpack.c.l.b16 %v1421
    %v1493 = vunpack.c.l.b16 %v1422
    %v1494 = vunpack.c.l.b16 %v1423
    %v1495 = vunpack.c.l.b16 %v1424
    %v1496 = vunpack.c.l.b16 %v1425
    %v1497 = vunpack.c.l.b16 %v1426
    %v1498 = vpack.c.b16 %v1467, %v1466
    %v1499 = vpack.c.b16 %v1469, %v1468
    %v1500 = vpack.c.b16 %v1471, %v1470
    %v1501 = vpack.c.b16 %v1473, %v1472
    %v1502 = vpack.c.b16 %v1475, %v1474
    %v1503 = vpack.c.b16 %v1477, %v1476
    %v1504 = vpack.c.b16 %v1479, %v1478
    %v1505 = vpack.c.b16 %v1481, %v1480
    %v1506 = vpack.c.b16 %v1483, %v1482
    %v1507 = vpack.c.b16 %v1485, %v1484
    %v1508 = vpack.c.b16 %v1487, %v1486
    %v1509 = vpack.c.b16 %v1489, %v1488
    %v1510 = vpack.c.b16 %v1491, %v1490
    %v1511 = vpack.c.b16 %v1493, %v1492
    %v1512 = vpack.c.b16 %v1495, %v1494
    %v1513 = vpack.c.b16 %v1497, %v1496
    %1530 = vmatprep.subr.bf16.mxu0 0
    %1531 = vmatpush1.bf16.msra.mxu0 %v1498
    %1532 = vmatprep.subr.bf16.mxu0 0
    %1533 = vmatpush1.bf16.msra.mxu0 %v1499
    %1534 = vmatprep.subr.bf16.mxu0 0
    %1535 = vmatpush1.bf16.msra.mxu0 %v1500
    %1536 = vmatprep.subr.bf16.mxu0 0
    %1537 = vmatpush1.bf16.msra.mxu0 %v1501
    %1538 = vmatprep.subr.bf16.mxu0 0
    %1539 = vmatpush1.bf16.msra.mxu0 %v1502
    %1540 = vmatprep.subr.bf16.mxu0 0
    %1541 = vmatpush1.bf16.msra.mxu0 %v1503
    %1542 = vmatprep.subr.bf16.mxu0 0
    %1543 = vmatpush1.bf16.msra.mxu0 %v1504
    %1544 = vmatprep.subr.bf16.mxu0 0
    %1545 = vmatpush1.bf16.msra.mxu0 %v1505
    %1546 = vmatprep.subr.bf16.mxu0 0
    %1547 = vmatpush1.bf16.msra.mxu0 %v1506
    %1548 = vmatprep.subr.bf16.mxu0 0
    %1549 = vmatpush1.bf16.msra.mxu0 %v1507
    %1550 = vmatprep.subr.bf16.mxu0 0
    %1551 = vmatpush1.bf16.msra.mxu0 %v1508
    %1552 = vmatprep.subr.bf16.mxu0 0
    %1553 = vmatpush1.bf16.msra.mxu0 %v1509
    %1554 = vmatprep.subr.bf16.mxu0 0
    %1555 = vmatpush1.bf16.msra.mxu0 %v1510
    %1556 = vmatprep.subr.bf16.mxu0 0
    %1557 = vmatpush1.bf16.msra.mxu0 %v1511
    %1558 = vmatprep.subr.bf16.mxu0 0
    %1559 = vmatpush1.bf16.msra.mxu0 %v1512
    %1560 = vmatprep.subr.bf16.mxu0 0
    %1561 = vmatpush1.bf16.msra.mxu0 %v1513
    %1562 = vmatprep.mubr.bf16.mxu0 %v1394
    %1563 = vmatmul.mubr.bf16.gmra.mrb[0].mxu0 %v1049
    %v1564 = vpop.f32.mrb[0].mxu0
    %v1565 = vadd.f32 %v1432, %v1564
    %v1566 = vpop.f32.mrb[0].mxu0
    %v1567 = vpop.f32.mrb[0].mxu0
    %v1568 = vadd.f32 %v1432, %v1567
    %v1569 = vpop.f32.mrb[0].mxu0
    %1570 = vdwg.mxu0
    %v1571 = vmax.f32 %v1565, 0.0
    %v1572 = vmax.f32 %v1568, 0.0
    %v1573 = vpack.c.bf16 %v1572, %v1571
    %1574 = vmatprep.subr.bf16.mxu0 0
    %1575 = vmatpush1.bf16.msra.mxu0 %v1573
    %1576 = vmatprep.subr.bf16.mxu0 0
    %1577 = vmatpush1.bf16.msra.mxu0 0
    %1578 = vmatprep.subr.bf16.mxu0 0
    %1579 = vmatpush1.bf16.msra.mxu0 0
    %1580 = vmatprep.subr.bf16.mxu0 0
    %1581 = vmatpush1.bf16.msra.mxu0 0
    %1582 = vmatprep.subr.bf16.mxu0 0
    %1583 = vmatpush1.bf16.msra.mxu0 0
    %1584 = vmatprep.subr.bf16.mxu0 0
    %1585 = vmatpush1.bf16.msra.mxu0 0
    %1586 = vmatprep.subr.bf16.mxu0 0
    %1587 = vmatpush1.bf16.msra.mxu0 0
    %1588 = vmatprep.subr.bf16.mxu0 0
    %1589 = vmatpush1.bf16.msra.mxu0 0
    %1590 = vmatprep.subr.bf16.mxu0 0
    %1591 = vmatpush1.bf16.msra.mxu0 0
    %1592 = vmatprep.subr.bf16.mxu0 0
    %1593 = vmatpush1.bf16.msra.mxu0 0
    %1594 = vmatprep.subr.bf16.mxu0 0
    %1595 = vmatpush1.bf16.msra.mxu0 0
    %1596 = vmatprep.subr.bf16.mxu0 0
    %1597 = vmatpush1.bf16.msra.mxu0 0
    %1598 = vmatprep.subr.bf16.mxu0 0
    %1599 = vmatpush1.bf16.msra.mxu0 0
    %1600 = vmatprep.subr.bf16.mxu0 0
    %1601 = vmatpush1.bf16.msra.mxu0 0
    %1602 = vmatprep.subr.bf16.mxu0 0
    %1603 = vmatpush1.bf16.msra.mxu0 0
    %1604 = vmatprep.subr.bf16.mxu0 0
    %1605 = vmatpush1.bf16.msra.mxu0 0
    %1606 = vmatprep.mubr.bf16.mxu0 0
    %1607 = vmatmul.mubr.bf16.gmra.mrb[0].mxu0 %v771
    %v1608 = vpop.f32.mrb[0].mxu0
    %v1609 = vadd.f32 0.0, %v1608
    %v1610 = vpop.f32.mrb[0].mxu0
    %v1611 = vpop.f32.mrb[0].mxu0
    %v1612 = vadd.f32 0.0, %v1611
    %v1613 = vpop.f32.mrb[0].mxu0
    %1614 = vdwg.mxu0
    %v1615 = vmul.f32 %v1609, %v520
    %v1616 = vmul.f32 %v1612, %v521
    %v1617 = vpack.c.bf16 %v1616, %v1615
    %v1618 = vld [vmem:[#allocation14] sm:$0xf]
    %v1619 = vld [vmem:[#allocation14 + $0x4] sm:$0xf]
    %v1620 = vld [vmem:[#allocation14 + $0x8] sm:$0xf]
    %v1621 = vld [vmem:[#allocation14 + $0xc] sm:$0xf]
    %v1622 = vld [vmem:[#allocation14 + $0x10] sm:$0xf]
    %v1623 = vld [vmem:[#allocation14 + $0x14] sm:$0xf]
    %v1624 = vld [vmem:[#allocation14 + $0x18] sm:$0xf]
    %v1625 = vld [vmem:[#allocation14 + $0x1c] sm:$0xf]
    %v1626 = vld [vmem:[#allocation14 + $0x20] sm:$0xf]
    %v1627 = vld [vmem:[#allocation14 + $0x24] sm:$0xf]
    %v1628 = vld [vmem:[#allocation14 + $0x28] sm:$0xf]
    %v1629 = vld [vmem:[#allocation14 + $0x2c] sm:$0xf]
    %v1630 = vld [vmem:[#allocation14 + $0x30] sm:$0xf]
    %v1631 = vld [vmem:[#allocation14 + $0x34] sm:$0xf]
    %v1632 = vld [vmem:[#allocation14 + $0x38] sm:$0xf]
    %v1633 = vld [vmem:[#allocation14 + $0x3c] sm:$0xf]
    %v1634 = vld [vmem:[#allocation14 + $0x40] sm:$0xf]
    %v1635 = vld [vmem:[#allocation14 + $0x44] sm:$0xf]
    %v1636 = vld [vmem:[#allocation14 + $0x48] sm:$0xf]
    %v1637 = vld [vmem:[#allocation14 + $0x4c] sm:$0xf]
    %v1638 = vld [vmem:[#allocation14 + $0x50] sm:$0xf]
    %v1639 = vld [vmem:[#allocation14 + $0x54] sm:$0xf]
    %v1640 = vld [vmem:[#allocation14 + $0x58] sm:$0xf]
    %v1641 = vld [vmem:[#allocation14 + $0x5c] sm:$0xf]
    %v1642 = vld [vmem:[#allocation14 + $0x60] sm:$0xf]
    %v1643 = vld [vmem:[#allocation14 + $0x64] sm:$0xf]
    %v1644 = vld [vmem:[#allocation14 + $0x68] sm:$0xf]
    %v1645 = vld [vmem:[#allocation14 + $0x6c] sm:$0xf]
    %v1646 = vld [vmem:[#allocation14 + $0x70] sm:$0xf]
    %v1647 = vld [vmem:[#allocation14 + $0x74] sm:$0xf]
    %v1648 = vld [vmem:[#allocation14 + $0x78] sm:$0xf]
    %v1649 = vld [vmem:[#allocation14 + $0x7c] sm:$0xf]
    %v1650 = vld [vmem:[%s17] sm:$0x1]
    %v1652 = vlaneseq
    %v1653 = vshrl.u32 %v1652, 7
    %v1654 = vsub.s32 0, %v1653
    %v1655 = vrot.slane %v1650, %v1654
    %v1689 = vunpack.c.l.b16 %v1618
    %v1690 = vunpack.c.l.b16 %v1619
    %v1691 = vunpack.c.l.b16 %v1620
    %v1692 = vunpack.c.l.b16 %v1621
    %v1693 = vunpack.c.l.b16 %v1622
    %v1694 = vunpack.c.l.b16 %v1623
    %v1695 = vunpack.c.l.b16 %v1624
    %v1696 = vunpack.c.l.b16 %v1625
    %v1697 = vunpack.c.l.b16 %v1626
    %v1698 = vunpack.c.l.b16 %v1627
    %v1699 = vunpack.c.l.b16 %v1628
    %v1700 = vunpack.c.l.b16 %v1629
    %v1701 = vunpack.c.l.b16 %v1630
    %v1702 = vunpack.c.l.b16 %v1631
    %v1703 = vunpack.c.l.b16 %v1632
    %v1704 = vunpack.c.l.b16 %v1633
    %v1705 = vunpack.c.l.b16 %v1634
    %v1706 = vunpack.c.l.b16 %v1635
    %v1707 = vunpack.c.l.b16 %v1636
    %v1708 = vunpack.c.l.b16 %v1637
    %v1709 = vunpack.c.l.b16 %v1638
    %v1710 = vunpack.c.l.b16 %v1639
    %v1711 = vunpack.c.l.b16 %v1640
    %v1712 = vunpack.c.l.b16 %v1641
    %v1713 = vunpack.c.l.b16 %v1642
    %v1714 = vunpack.c.l.b16 %v1643
    %v1715 = vunpack.c.l.b16 %v1644
    %v1716 = vunpack.c.l.b16 %v1645
    %v1717 = vunpack.c.l.b16 %v1646
    %v1718 = vunpack.c.l.b16 %v1647
    %v1719 = vunpack.c.l.b16 %v1648
    %v1720 = vunpack.c.l.b16 %v1649
    %v1721 = vpack.c.b16 %v1690, %v1689
    %v1722 = vpack.c.b16 %v1692, %v1691
    %v1723 = vpack.c.b16 %v1694, %v1693
    %v1724 = vpack.c.b16 %v1696, %v1695
    %v1725 = vpack.c.b16 %v1698, %v1697
    %v1726 = vpack.c.b16 %v1700, %v1699
    %v1727 = vpack.c.b16 %v1702, %v1701
    %v1728 = vpack.c.b16 %v1704, %v1703
    %v1729 = vpack.c.b16 %v1706, %v1705
    %v1730 = vpack.c.b16 %v1708, %v1707
    %v1731 = vpack.c.b16 %v1710, %v1709
    %v1732 = vpack.c.b16 %v1712, %v1711
    %v1733 = vpack.c.b16 %v1714, %v1713
    %v1734 = vpack.c.b16 %v1716, %v1715
    %v1735 = vpack.c.b16 %v1718, %v1717
    %v1736 = vpack.c.b16 %v1720, %v1719
    %1753 = vmatprep.subr.bf16.mxu0 0
    %1754 = vmatpush1.bf16.msra.mxu0 %v1721
    %1755 = vmatprep.subr.bf16.mxu0 0
    %1756 = vmatpush1.bf16.msra.mxu0 %v1722
    %1757 = vmatprep.subr.bf16.mxu0 0
    %1758 = vmatpush1.bf16.msra.mxu0 %v1723
    %1759 = vmatprep.subr.bf16.mxu0 0
    %1760 = vmatpush1.bf16.msra.mxu0 %v1724
    %1761 = vmatprep.subr.bf16.mxu0 0
    %1762 = vmatpush1.bf16.msra.mxu0 %v1725
    %1763 = vmatprep.subr.bf16.mxu0 0
    %1764 = vmatpush1.bf16.msra.mxu0 %v1726
    %1765 = vmatprep.subr.bf16.mxu0 0
    %1766 = vmatpush1.bf16.msra.mxu0 %v1727
    %1767 = vmatprep.subr.bf16.mxu0 0
    %1768 = vmatpush1.bf16.msra.mxu0 %v1728
    %1769 = vmatprep.subr.bf16.mxu0 0
    %1770 = vmatpush1.bf16.msra.mxu0 %v1729
    %1771 = vmatprep.subr.bf16.mxu0 0
    %1772 = vmatpush1.bf16.msra.mxu0 %v1730
    %1773 = vmatprep.subr.bf16.mxu0 0
    %1774 = vmatpush1.bf16.msra.mxu0 %v1731
    %1775 = vmatprep.subr.bf16.mxu0 0
    %1776 = vmatpush1.bf16.msra.mxu0 %v1732
    %1777 = vmatprep.subr.bf16.mxu0 0
    %1778 = vmatpush1.bf16.msra.mxu0 %v1733
    %1779 = vmatprep.subr.bf16.mxu0 0
    %1780 = vmatpush1.bf16.msra.mxu0 %v1734
    %1781 = vmatprep.subr.bf16.mxu0 0
    %1782 = vmatpush1.bf16.msra.mxu0 %v1735
    %1783 = vmatprep.subr.bf16.mxu0 0
    %1784 = vmatpush1.bf16.msra.mxu0 %v1736
    %1785 = vmatprep.mubr.bf16.mxu0 %v1007
    %1786 = vmatmul.mubr.bf16.gmra.mrb[0].mxu0 %v1617
    %v1787 = vpop.f32.mrb[0].mxu0
    %v1788 = vadd.f32 %v1655, %v1787
    %v1789 = vpop.f32.mrb[0].mxu0
    %v1790 = vpop.f32.mrb[0].mxu0
    %v1791 = vadd.f32 %v1655, %v1790
    %v1792 = vpop.f32.mrb[0].mxu0
    %1793 = vdwg.mxu0
    %v1794 = vmax.f32 %v1788, 0.0
    %v1795 = vmax.f32 %v1791, 0.0
    %v1796 = vmul.f32 %v1794, %v1794
    %v1797 = vmul.f32 %v1795, %v1795
    %1798 = vadd.xlane.f32.xlu0 %v1796
    %v1799 = vpop.xlane.xlu0 %1798
    %1800 = vadd.xlane.f32.xlu0 %v1797
    %v1801 = vpop.xlane.xlu0 %1800
    %v1802 = vmax.f32 %v1799, 1e-24
    %v1803 = vmax.f32 %v1801, 1e-24
    %v1804 = vrsqrt.pop %v1802
    %v1805 = vrsqrt.pop %v1803
    %v1806 = vmul.f32 %v1794, %v1804
    %v1807 = vmul.f32 %v1795, %v1805
    %v1808 = vpack.c.bf16 %v1807, %v1806
    %v1809 = vld [vmem:[%s20] sm:$0xf]
    %v1810 = vld [vmem:[%s20 + $0x4] sm:$0xf]
    %v1811 = vld [vmem:[%s20 + $0x8] sm:$0xf]
    %v1812 = vld [vmem:[%s20 + $0xc] sm:$0xf]
    %v1813 = vld [vmem:[%s20 + $0x10] sm:$0xf]
    %v1814 = vld [vmem:[%s20 + $0x14] sm:$0xf]
    %v1815 = vld [vmem:[%s20 + $0x18] sm:$0xf]
    %v1816 = vld [vmem:[%s20 + $0x1c] sm:$0xf]
    %v1817 = vld [vmem:[%s20 + $0x20] sm:$0xf]
    %v1818 = vld [vmem:[%s20 + $0x24] sm:$0xf]
    %v1819 = vld [vmem:[%s20 + $0x28] sm:$0xf]
    %v1820 = vld [vmem:[%s20 + $0x2c] sm:$0xf]
    %v1821 = vld [vmem:[%s20 + $0x30] sm:$0xf]
    %v1822 = vld [vmem:[%s20 + $0x34] sm:$0xf]
    %v1823 = vld [vmem:[%s20 + $0x38] sm:$0xf]
    %v1824 = vld [vmem:[%s20 + $0x3c] sm:$0xf]
    %v1825 = vld [vmem:[%s21] sm:$0x1]
    %v1827 = vlaneseq
    %v1828 = vshrl.u32 %v1827, 7
    %v1829 = vsub.s32 0, %v1828
    %v1830 = vrot.slane %v1825, %v1829
    %v1848 = vunpack.c.l.b16 %v1809
    %v1849 = vunpack.c.l.b16 %v1810
    %v1850 = vunpack.c.l.b16 %v1811
    %v1851 = vunpack.c.l.b16 %v1812
    %v1852 = vunpack.c.l.b16 %v1813
    %v1853 = vunpack.c.l.b16 %v1814
    %v1854 = vunpack.c.l.b16 %v1815
    %v1855 = vunpack.c.l.b16 %v1816
    %v1856 = vunpack.c.l.b16 %v1817
    %v1857 = vunpack.c.l.b16 %v1818
    %v1858 = vunpack.c.l.b16 %v1819
    %v1859 = vunpack.c.l.b16 %v1820
    %v1860 = vunpack.c.l.b16 %v1821
    %v1861 = vunpack.c.l.b16 %v1822
    %v1862 = vunpack.c.l.b16 %v1823
    %v1863 = vunpack.c.l.b16 %v1824
    %v1864 = vpack.c.b16 %v1849, %v1848
    %v1865 = vpack.c.b16 %v1851, %v1850
    %v1866 = vpack.c.b16 %v1853, %v1852
    %v1867 = vpack.c.b16 %v1855, %v1854
    %v1868 = vpack.c.b16 %v1857, %v1856
    %v1869 = vpack.c.b16 %v1859, %v1858
    %v1870 = vpack.c.b16 %v1861, %v1860
    %v1871 = vpack.c.b16 %v1863, %v1862
    %1880 = vmatprep.subr.bf16.mxu0 0
    %1881 = vmatpush1.bf16.msra.mxu0 %v1864
    %1882 = vmatprep.subr.bf16.mxu0 0
    %1883 = vmatpush1.bf16.msra.mxu0 %v1865
    %1884 = vmatprep.subr.bf16.mxu0 0
    %1885 = vmatpush1.bf16.msra.mxu0 %v1866
    %1886 = vmatprep.subr.bf16.mxu0 0
    %1887 = vmatpush1.bf16.msra.mxu0 %v1867
    %1888 = vmatprep.subr.bf16.mxu0 0
    %1889 = vmatpush1.bf16.msra.mxu0 %v1868
    %1890 = vmatprep.subr.bf16.mxu0 0
    %1891 = vmatpush1.bf16.msra.mxu0 %v1869
    %1892 = vmatprep.subr.bf16.mxu0 0
    %1893 = vmatpush1.bf16.msra.mxu0 %v1870
    %1894 = vmatprep.subr.bf16.mxu0 0
    %1895 = vmatpush1.bf16.msra.mxu0 %v1871
    %1896 = vmatprep.subr.bf16.mxu0 0
    %1897 = vmatpush1.bf16.msra.mxu0 0
    %1898 = vmatprep.subr.bf16.mxu0 0
    %1899 = vmatpush1.bf16.msra.mxu0 0
    %1900 = vmatprep.subr.bf16.mxu0 0
    %1901 = vmatpush1.bf16.msra.mxu0 0
    %1902 = vmatprep.subr.bf16.mxu0 0
    %1903 = vmatpush1.bf16.msra.mxu0 0
    %1904 = vmatprep.subr.bf16.mxu0 0
    %1905 = vmatpush1.bf16.msra.mxu0 0
    %1906 = vmatprep.subr.bf16.mxu0 0
    %1907 = vmatpush1.bf16.msra.mxu0 0
    %1908 = vmatprep.subr.bf16.mxu0 0
    %1909 = vmatpush1.bf16.msra.mxu0 0
    %1910 = vmatprep.subr.bf16.mxu0 0
    %1911 = vmatpush1.bf16.msra.mxu0 0
    %1912 = vmatprep.mubr.bf16.mxu0 0
    %1913 = vmatmul.mubr.bf16.gmra.mrb[0].mxu0 %v1808
    %v1914 = vpop.f32.mrb[0].mxu0
    %v1915 = vadd.f32 %v1830, %v1914
    %v1916 = vpop.f32.mrb[0].mxu0
    %v1917 = vpop.f32.mrb[0].mxu0
    %v1918 = vadd.f32 %v1830, %v1917
    %v1919 = vpop.f32.mrb[0].mxu0
    %1920 = vdwg.mxu0
    %v1921 = vmax.f32 %v1915, 0.0
    %v1922 = vmax.f32 %v1918, 0.0
    %v1923 = vld [vmem:[#allocation17] sm:$0xf]
    %v1924 = vld [vmem:[#allocation17 + $0x4] sm:$0xf]
    %v1925 = vld [vmem:[#allocation17 + $0x8] sm:$0xf]
    %v1926 = vld [vmem:[#allocation17 + $0xc] sm:$0xf]
    %v1927 = vld [vmem:[#allocation17 + $0x10] sm:$0xf]
    %v1928 = vld [vmem:[#allocation17 + $0x14] sm:$0xf]
    %v1929 = vld [vmem:[#allocation17 + $0x18] sm:$0xf]
    %v1930 = vld [vmem:[#allocation17 + $0x1c] sm:$0xf]
    %v1931 = vld [vmem:[#allocation17 + $0x20] sm:$0xf]
    %v1932 = vld [vmem:[#allocation17 + $0x24] sm:$0xf]
    %v1933 = vld [vmem:[#allocation17 + $0x28] sm:$0xf]
    %v1934 = vld [vmem:[#allocation17 + $0x2c] sm:$0xf]
    %v1935 = vld [vmem:[#allocation17 + $0x30] sm:$0xf]
    %v1936 = vld [vmem:[#allocation17 + $0x34] sm:$0xf]
    %v1937 = vld [vmem:[#allocation17 + $0x38] sm:$0xf]
    %v1938 = vld [vmem:[#allocation17 + $0x3c] sm:$0xf]
    %v1939 = vpack.c.bf16 %v1922, %v1921
    %v1940 = vld [vmem:[%s23] sm:$0x1]
    %v1942 = vlaneseq
    %v1943 = vshrl.u32 %v1942, 7
    %v1944 = vsub.s32 0, %v1943
    %v1945 = vrot.slane %v1940, %v1944
    %v1963 = vunpack.c.l.b16 %v1923
    %v1964 = vunpack.c.l.b16 %v1924
    %v1965 = vunpack.c.l.b16 %v1925
    %v1966 = vunpack.c.l.b16 %v1926
    %v1967 = vunpack.c.l.b16 %v1927
    %v1968 = vunpack.c.l.b16 %v1928
    %v1969 = vunpack.c.l.b16 %v1929
    %v1970 = vunpack.c.l.b16 %v1930
    %v1971 = vunpack.c.l.b16 %v1931
    %v1972 = vunpack.c.l.b16 %v1932
    %v1973 = vunpack.c.l.b16 %v1933
    %v1974 = vunpack.c.l.b16 %v1934
    %v1975 = vunpack.c.l.b16 %v1935
    %v1976 = vunpack.c.l.b16 %v1936
    %v1977 = vunpack.c.l.b16 %v1937
    %v1978 = vunpack.c.l.b16 %v1938
    %v1979 = vpack.c.b16 %v1964, %v1963
    %v1980 = vpack.c.b16 %v1966, %v1965
    %v1981 = vpack.c.b16 %v1968, %v1967
    %v1982 = vpack.c.b16 %v1970, %v1969
    %v1983 = vpack.c.b16 %v1972, %v1971
    %v1984 = vpack.c.b16 %v1974, %v1973
    %v1985 = vpack.c.b16 %v1976, %v1975
    %v1986 = vpack.c.b16 %v1978, %v1977
    %1995 = vmatprep.subr.bf16.mxu0 0
    %1996 = vmatpush1.bf16.msra.mxu0 %v1979
    %1997 = vmatprep.subr.bf16.mxu0 0
    %1998 = vmatpush1.bf16.msra.mxu0 %v1980
    %1999 = vmatprep.subr.bf16.mxu0 0
    %2000 = vmatpush1.bf16.msra.mxu0 %v1981
    %2001 = vmatprep.subr.bf16.mxu0 0
    %2002 = vmatpush1.bf16.msra.mxu0 %v1982
    %2003 = vmatprep.subr.bf16.mxu0 0
    %2004 = vmatpush1.bf16.msra.mxu0 %v1983
    %2005 = vmatprep.subr.bf16.mxu0 0
    %2006 = vmatpush1.bf16.msra.mxu0 %v1984
    %2007 = vmatprep.subr.bf16.mxu0 0
    %2008 = vmatpush1.bf16.msra.mxu0 %v1985
    %2009 = vmatprep.subr.bf16.mxu0 0
    %2010 = vmatpush1.bf16.msra.mxu0 %v1986
    %2011 = vmatprep.subr.bf16.mxu0 0
    %2012 = vmatpush1.bf16.msra.mxu0 0
    %2013 = vmatprep.subr.bf16.mxu0 0
    %2014 = vmatpush1.bf16.msra.mxu0 0
    %2015 = vmatprep.subr.bf16.mxu0 0
    %2016 = vmatpush1.bf16.msra.mxu0 0
    %2017 = vmatprep.subr.bf16.mxu0 0
    %2018 = vmatpush1.bf16.msra.mxu0 0
    %2019 = vmatprep.subr.bf16.mxu0 0
    %2020 = vmatpush1.bf16.msra.mxu0 0
    %2021 = vmatprep.subr.bf16.mxu0 0
    %2022 = vmatpush1.bf16.msra.mxu0 0
    %2023 = vmatprep.subr.bf16.mxu0 0
    %2024 = vmatpush1.bf16.msra.mxu0 0
    %2025 = vmatprep.subr.bf16.mxu0 0
    %2026 = vmatpush1.bf16.msra.mxu0 0
    %2027 = vmatprep.mubr.bf16.mxu0 0
    %2028 = vmatmul.mubr.bf16.gmra.mrb[0].mxu0 %v1939
    %v2029 = vpop.f32.mrb[0].mxu0
    %v2030 = vadd.f32 %v1945, %v2029
    %v2031 = vpop.f32.mrb[0].mxu0
    %v2032 = vpop.f32.mrb[0].mxu0
    %v2033 = vadd.f32 %v1945, %v2032
    %v2034 = vpop.f32.mrb[0].mxu0
    %2035 = vdwg.mxu0
    %2036 = vst [vmem:[#allocation18] sm:$0xff] %v2030
    %2037 = vst [vmem:[#allocation18 + $0x8] sm:$0xff] %v2033
    // Predicated region
    $region134: #{tpu_custom_call.1} parent=1 // pred_check
      _
    $region135: #{tpu_custom_call.1} parent=1 // pred_check_branch
      %2039 = sbr.rel (0) target = $region137
    $region136: #{tpu_custom_call.1} parent=1 // pred_region
      %s2041 = ssub.s32 256, 256
      %2042 = vsyncadd [#allocation5], %s2041
      %s2043 = sshll.u32 [#allocation18], 4
      %s2044 = int_to_ptr.vmem [resolvable:$true] %s2043
      %2049 = dma.vmem_to_hbm [thread:$0]  %s2044, 256, %s24, [#allocation5], 128, 128, 8
    $region137: #{tpu_custom_call.1} parent=1 // pred_fallthru
      _
    // Predicated region
    $region138: #{tpu_custom_call.1} parent=1 // pred_check
      _
    $region139: #{tpu_custom_call.1} parent=1 // pred_check_branch
      %2051 = sbr.rel (0) target = $region141
    $region140: #{tpu_custom_call.1} parent=1 // pred_region
      %2052 = dma.done [#allocation5], 256
    $region141: #{tpu_custom_call.1} parent=1 // pred_fallthru
      _
    %2053 = vsyncpa [#allocation4], 1
    %2054 = vsyncpa [#allocation7], 1
    %2055 = vsyncpa [#allocation10], 1
    %2056 = vsyncpa [#allocation13], 1
    %2057 = vsyncpa [#allocation16], 1
    %2058 = vsyncpa [#allocation5], 1

</llo_original>
